<compile_context>
chip_gen: v6e
topology: v6e:2x2x1
jax: 0.10.0
libtpu: 0.0.40
codegen_flags: <defaults>
</compile_context>

<pallas_src>
import functools

import jax
import jax.numpy as jnp
from jax.experimental import pallas as pl
from jax.experimental.pallas import tpu as pltpu

HIDDEN = 100          # hidden_layer in the PyTorch script (logical size)
H_PAD = 128           # lane-padded hidden size used by the kernel layout
NUM_INPUTS = 128      # RAM observation size (already lane-aligned)
NUM_ACTIONS = 6       # action_space.n
N_GATES = 3           # LSTM gates needed with zero state: [i, g, o]


def _round_up(x, m):
    return (x + m - 1) // m * m


# ---------------------------------------------------------------------------
# Pass 1: MLP + LSTM(zero state) + fused adv/value head, per batch tile.
# Outputs the lane-dense head tile and per-tile (row-masked) column sums used
# to form the global advantage mean.
# ---------------------------------------------------------------------------
def _head_kernel(nvalid_ref, x_ref, w1_ref, b1_ref, w2_ref, b2_ref,
                 wg_ref, bg_ref, wh_ref, bh_ref, head_ref, colsum_ref):
    bf16 = jnp.bfloat16
    f32 = jnp.float32

    x = x_ref[...].astype(bf16)

    # linear1 + ReLU    (128 -> 128-padded)
    h1 = jnp.dot(x, w1_ref[...], preferred_element_type=f32) + b1_ref[...]
    h1 = jnp.maximum(h1, 0.0)

    # linear2 + ReLU    (128-padded -> 128-padded)
    h2 = jnp.dot(h1.astype(bf16), w2_ref[...], preferred_element_type=f32) + b2_ref[...]
    h2 = jnp.maximum(h2, 0.0)

    # LSTMCell with zero initial (h, c): h0 @ W_hh == 0 and f*c0 == 0, so only
    # gates [i, g, o] are needed -> one stacked (128, 384) MXU matmul.
    gates = jnp.dot(h2.astype(bf16), wg_ref[...], preferred_element_type=f32) + bg_ref[...]
    i_g = jax.nn.sigmoid(gates[:, 0 * H_PAD:1 * H_PAD])
    g_g = jnp.tanh(gates[:, 1 * H_PAD:2 * H_PAD])
    o_g = jax.nn.sigmoid(gates[:, 2 * H_PAD:3 * H_PAD])
    c_new = i_g * g_g                                   # c0 == 0
    h_act = jnp.maximum(o_g * jnp.tanh(c_new), 0.0)     # ReLU on LSTM hidden output
    # Padded lanes: gate pre-activation is 0 -> o = 0.5, tanh(i*g) = 0 -> h_act = 0,
    # so padding never leaks into the head matmul.

    # Fused head: lanes 0..NUM_ACTIONS-1 = advantage_j + value (value folded in at
    # pack time), lane NUM_ACTIONS = pure value, remaining lanes exactly zero.
    head = jnp.dot(h_act.astype(bf16), wh_ref[...], preferred_element_type=f32) + bh_ref[...]
    head_ref[...] = head

    # Per-tile column sums over *valid* rows only (padded batch rows masked out),
    # replicated over 8 sublanes so the store is a fully aligned (8, 128) tile.
    tb = head.shape[0]
    row = pl.program_id(0) * tb + jax.lax.broadcasted_iota(jnp.int32, head.shape, 0)
    valid = row < nvalid_ref[0, 0]
    colsum = jnp.sum(jnp.where(valid, head, 0.0), axis=0, keepdims=True)   # (1, 128)
    colsum_ref[...] = jnp.broadcast_to(colsum, colsum_ref.shape)


# ---------------------------------------------------------------------------
# Pass 2: subtract the global advantage mean (tiny streaming kernel).
# ---------------------------------------------------------------------------
def _subtract_mean_kernel(mean_ref, head_ref, out_ref):
    out_ref[...] = head_ref[...] - mean_ref[0, 0]


def neural_network_forward(x, kparams, *, block_b=512):
    """x: (B, NUM_INPUTS) float32. Returns (B, NUM_ACTIONS) float32."""
    B = x.shape[0]
    TB = _round_up(min(block_b, _round_up(B, 8)), 8)
    B_pad = _round_up(B, TB)
    nt = B_pad // TB
    if B_pad != B:
        x = jnp.concatenate(
            [x, jnp.zeros((B_pad - B, x.shape[1]), x.dtype)], axis=0)
    n_valid = jnp.array([[B]], dtype=jnp.int32)

    smem = pl.BlockSpec(memory_space=pltpu.MemorySpace.SMEM)
    row_spec = pl.BlockSpec((TB, H_PAD), lambda i: (i, 0))

    def const(shape):
        # Weights/biases: constant block index across the batch grid, so they are
        # DMA'd once and stay VMEM-resident while activation tiles stream.
        return pl.BlockSpec(shape, lambda i: (0, 0))

    head, colsum = pl.pallas_call(
        _head_kernel,
        grid=(nt,),
        out_shape=(jax.ShapeDtypeStruct((B_pad, H_PAD), jnp.float32),
                   jax.ShapeDtypeStruct((nt * 8, H_PAD), jnp.float32)),
        in_specs=[smem,
                  pl.BlockSpec((TB, NUM_INPUTS), lambda i: (i, 0)),
                  const((NUM_INPUTS, H_PAD)), const((1, H_PAD)),
                  const((H_PAD, H_PAD)), const((1, H_PAD)),
                  const((H_PAD, N_GATES * H_PAD)), const((1, N_GATES * H_PAD)),
                  const((H_PAD, H_PAD)), const((1, H_PAD))],
        out_specs=(row_spec, pl.BlockSpec((8, H_PAD), lambda i: (i, 0))),
        compiler_params=pltpu.CompilerParams(
            dimension_semantics=("parallel",)),
    )(n_valid, x,
      kparams["w1"], kparams["b1"], kparams["w2"], kparams["b2"],
      kparams["w_gates"], kparams["b_gates"],
      kparams["w_head"], kparams["b_head"])

    # Tiny cross-tile combine (a few hundred floats): head lanes 0..5 hold
    # adv_j + value and lane 6 holds value, so
    #   sum(adv) = sum(lanes < 6) - NUM_ACTIONS * sum(lane 6).
    total = jnp.sum(colsum, axis=0) / 8.0          # column sums over valid rows
    adv_sum = jnp.sum(total[:NUM_ACTIONS]) - NUM_ACTIONS * total[NUM_ACTIONS]
    adv_mean = (adv_sum / (B * NUM_ACTIONS)).astype(jnp.float32).reshape(1, 1)

    out = pl.pallas_call(
        _subtract_mean_kernel,
        grid=(nt,),
        out_shape=jax.ShapeDtypeStruct((B_pad, H_PAD), jnp.float32),
        in_specs=[smem, row_spec],
        out_specs=row_spec,
        compiler_params=pltpu.CompilerParams(
            dimension_semantics=("parallel",)),
    )(adv_mean, head)

    return out[:B, :NUM_ACTIONS]


# ---------------------------------------------------------------------------
# Parameter construction: torch-shaped params -> padded/fused bf16 kernel layout.
# ---------------------------------------------------------------------------
def init_torch_like_params(key):
    """Synthetic parameters with the same shapes as the torch module."""
    ks = jax.random.split(key, 12)

    def u(k, shape, fan_in):
        bound = 1.0 / jnp.sqrt(jnp.float32(fan_in))
        return jax.random.uniform(k, shape, jnp.float32, -bound, bound)

    return {
        "w1": u(ks[0], (HIDDEN, NUM_INPUTS), NUM_INPUTS),   # linear1.weight
        "b1": u(ks[1], (HIDDEN,), NUM_INPUTS),              # linear1.bias
        "w2": u(ks[2], (HIDDEN, HIDDEN), HIDDEN),           # linear2.weight
        "b2": u(ks[3], (HIDDEN,), HIDDEN),                  # linear2.bias
        "w_ih": u(ks[4], (4 * HIDDEN, HIDDEN), HIDDEN),     # lstm.weight_ih [i,f,g,o]
        "w_hh": u(ks[5], (4 * HIDDEN, HIDDEN), HIDDEN),     # lstm.weight_hh (unused: h0==0)
        "b_ih": u(ks[6], (4 * HIDDEN,), HIDDEN),
        "b_hh": u(ks[7], (4 * HIDDEN,), HIDDEN),
        "w_adv": u(ks[8], (NUM_ACTIONS, HIDDEN), HIDDEN),   # advantage.weight
        "b_adv": u(ks[9], (NUM_ACTIONS,), HIDDEN),
        "w_val": u(ks[10], (1, HIDDEN), HIDDEN),            # value.weight
        "b_val": u(ks[11], (1,), HIDDEN),
    }


def pack_params(tp):
    """Torch-shaped params -> padded, stacked, value-folded, bf16 kernel layout."""
    def pad_mat(w_in_out, rows, cols):
        out = jnp.zeros((rows, cols), jnp.float32)
        return out.at[:w_in_out.shape[0], :w_in_out.shape[1]].set(w_in_out)

    def pad_vec(b, cols):
        out = jnp.zeros((1, cols), jnp.float32)
        return out.at[0, :b.shape[0]].set(b)

    w1 = pad_mat(tp["w1"].T, NUM_INPUTS, H_PAD)
    b1 = pad_vec(tp["b1"], H_PAD)
    w2 = pad_mat(tp["w2"].T, H_PAD, H_PAD)
    b2 = pad_vec(tp["b2"], H_PAD)

    # LSTM gates: torch order [i, f, g, o]; the f-gate is dropped (c0 == 0 makes
    # f*c0 == 0).  Kept gates [i, g, o] are packed into 128-lane-aligned slabs.
    w_gates = jnp.zeros((H_PAD, N_GATES * H_PAD), jnp.float32)
    b_gates = jnp.zeros((1, N_GATES * H_PAD), jnp.float32)
    for slot, g in enumerate((0, 2, 3)):                       # i, g, o
        wg = tp["w_ih"][g * HIDDEN:(g + 1) * HIDDEN, :].T       # (HIDDEN, HIDDEN)
        bg = (tp["b_ih"][g * HIDDEN:(g + 1) * HIDDEN]
              + tp["b_hh"][g * HIDDEN:(g + 1) * HIDDEN])
        w_gates = w_gates.at[:HIDDEN, slot * H_PAD:slot * H_PAD + HIDDEN].set(wg)
        b_gates = b_gates.at[0, slot * H_PAD:slot * H_PAD + HIDDEN].set(bg)

    # Fused head with the value column folded into the advantage lanes:
    #   lanes 0..5: adv_j + value     lane 6: value     lanes 7..127: 0
    w_head = jnp.zeros((H_PAD, H_PAD), jnp.float32)
    w_head = w_head.at[:HIDDEN, :NUM_ACTIONS].set(tp["w_adv"].T + tp["w_val"].T)
    w_head = w_head.at[:HIDDEN, NUM_ACTIONS].set(tp["w_val"][0, :])
    b_head = jnp.zeros((1, H_PAD), jnp.float32)
    b_head = b_head.at[0, :NUM_ACTIONS].set(tp["b_adv"] + tp["b_val"][0])
    b_head = b_head.at[0, NUM_ACTIONS].set(tp["b_val"][0])

    bf = jnp.bfloat16
    return {"w1": w1.astype(bf), "b1": b1,
            "w2": w2.astype(bf), "b2": b2,
            "w_gates": w_gates.astype(bf), "b_gates": b_gates,
            "w_head": w_head.astype(bf), "b_head": b_head}


# ---------------------------------------------------------------------------
# Pure-JAX f32 reference with full torch LSTMCell semantics (zero initial state).
# ---------------------------------------------------------------------------
def _reference_forward(x, tp):
    h1 = jnp.maximum(x @ tp["w1"].T + tp["b1"], 0.0)
    h2 = jnp.maximum(h1 @ tp["w2"].T + tp["b2"], 0.0)
    B = x.shape[0]
    h0 = jnp.zeros((B, HIDDEN), jnp.float32)
    c0 = jnp.zeros((B, HIDDEN), jnp.float32)
    gates = h2 @ tp["w_ih"].T + tp["b_ih"] + h0 @ tp["w_hh"].T + tp["b_hh"]
    i_g = jax.nn.sigmoid(gates[:, 0 * HIDDEN:1 * HIDDEN])
    f_g = jax.nn.sigmoid(gates[:, 1 * HIDDEN:2 * HIDDEN])
    g_g = jnp.tanh(gates[:, 2 * HIDDEN:3 * HIDDEN])
    o_g = jax.nn.sigmoid(gates[:, 3 * HIDDEN:4 * HIDDEN])
    c1 = f_g * c0 + i_g * g_g
    h_act = jnp.maximum(o_g * jnp.tanh(c1), 0.0)
    adv = h_act @ tp["w_adv"].T + tp["b_adv"]
    val = h_act @ tp["w_val"].T + tp["b_val"]
    return val + adv - jnp.mean(adv)    # global mean, as in the torch module


if __name__ == "__main__":
    key = jax.random.PRNGKey(0)
    k_params, k_x = jax.random.split(key)

    torch_params = init_torch_like_params(k_params)
    kernel_params = pack_params(torch_params)

    # B deliberately not a multiple of the 128-row tile: exercises batch padding,
    # the row-masked global advantage mean, and a 2-step batch grid.
    B = 200
    x = jax.random.normal(k_x, (B, NUM_INPUTS), jnp.float32)

    fwd = jax.jit(functools.partial(neural_network_forward, block_b=128))
    out = jax.block_until_ready(fwd(x, kernel_params))

    ref = _reference_forward(x, torch_params)
    assert out.shape == (B, NUM_ACTIONS)
    # bf16-stored weights / bf16 MXU operands vs the f32 reference -> ~1e-3 level
    # differences; 1e-2 tolerance is comfortably above that.
    max_err = float(jnp.max(jnp.abs(out - ref)))
    assert jnp.allclose(out, ref, atol=1e-2, rtol=1e-2), \
        f"Pallas kernel mismatch vs JAX reference (max abs err {max_err})"

    print("KERNEL_OK")
</pallas_src>

<mosaic_0001>
module attributes {stable_mosaic.version = 11 : i64} {
  func.func @_head_kernel(%arg0: i32, %arg1: memref<1x1xi32, #tpu.memory_space<smem>>, %arg2: memref<128x128xf32, #tpu.memory_space<vmem>>, %arg3: memref<128x128xbf16, #tpu.memory_space<vmem>>, %arg4: memref<1x128xf32, #tpu.memory_space<vmem>>, %arg5: memref<128x128xbf16, #tpu.memory_space<vmem>>, %arg6: memref<1x128xf32, #tpu.memory_space<vmem>>, %arg7: memref<128x384xbf16, #tpu.memory_space<vmem>>, %arg8: memref<1x384xf32, #tpu.memory_space<vmem>>, %arg9: memref<128x128xbf16, #tpu.memory_space<vmem>>, %arg10: memref<1x128xf32, #tpu.memory_space<vmem>>, %arg11: memref<128x128xf32, #tpu.memory_space<vmem>>, %arg12: memref<8x128xf32, #tpu.memory_space<vmem>>) attributes {dimension_semantics = [#tpu.dimension_semantics<parallel>], iteration_bounds = array<i64: 2>, scalar_prefetch = 0 : i64, scratch_operands = 0 : i64, tpu.core_type = #tpu.core_type<tc>, window_params = [{transform_indices = @transform_0, window_bounds = array<i64: 1, 1>}, {transform_indices = @transform_1, window_bounds = array<i64: 128, 128>}, {pipeline_mode = #tpu.pipeline_mode<synchronous>, transform_indices = @transform_2, window_bounds = array<i64: 128, 128>}, {pipeline_mode = #tpu.pipeline_mode<synchronous>, transform_indices = @transform_3, window_bounds = array<i64: 1, 128>}, {pipeline_mode = #tpu.pipeline_mode<synchronous>, transform_indices = @transform_4, window_bounds = array<i64: 128, 128>}, {pipeline_mode = #tpu.pipeline_mode<synchronous>, transform_indices = @transform_5, window_bounds = array<i64: 1, 128>}, {pipeline_mode = #tpu.pipeline_mode<synchronous>, transform_indices = @transform_6, window_bounds = array<i64: 128, 384>}, {pipeline_mode = #tpu.pipeline_mode<synchronous>, transform_indices = @transform_7, window_bounds = array<i64: 1, 384>}, {pipeline_mode = #tpu.pipeline_mode<synchronous>, transform_indices = @transform_8, window_bounds = array<i64: 128, 128>}, {pipeline_mode = #tpu.pipeline_mode<synchronous>, transform_indices = @transform_9, window_bounds = array<i64: 1, 128>}, {transform_indices = @transform_10, window_bounds = array<i64: 128, 128>}, {transform_indices = @transform_11, window_bounds = array<i64: 8, 128>}]} {
    %c0 = arith.constant 0 : index
    %c0_0 = arith.constant 0 : index
    %0 = vector.load %arg2[%c0, %c0_0] : memref<128x128xf32, #tpu.memory_space<vmem>>, vector<128x128xf32>
    %1 = arith.truncf %0 : vector<128x128xf32> to vector<128x128xbf16>
    %c0_1 = arith.constant 0 : index
    %c0_2 = arith.constant 0 : index
    %2 = vector.load %arg3[%c0_1, %c0_2] : memref<128x128xbf16, #tpu.memory_space<vmem>>, vector<128x128xbf16>
    %cst = arith.constant dense<0.000000e+00> : vector<128x128xf32>
    %3 = tpu.matmul %1, %2, %cst {dimension_numbers = #tpu.dot_dimension_numbers<[1], [0], [0], [1], [0, 0, 1, 1], [], []>} : vector<128x128xbf16>, vector<128x128xbf16>, vector<128x128xf32> -> vector<128x128xf32>
    %c0_3 = arith.constant 0 : index
    %c0_4 = arith.constant 0 : index
    %4 = vector.load %arg4[%c0_3, %c0_4] : memref<1x128xf32, #tpu.memory_space<vmem>>, vector<1x128xf32>
    %5 = vector.broadcast %4 : vector<1x128xf32> to vector<128x128xf32>
    %6 = arith.addf %3, %5 : vector<128x128xf32>
    %cst_5 = arith.constant 0.000000e+00 : f32
    %7 = vector.broadcast %cst_5 : f32 to vector<128x128xf32>
    %8 = arith.maximumf %6, %7 : vector<128x128xf32>
    %9 = arith.truncf %8 : vector<128x128xf32> to vector<128x128xbf16>
    %c0_6 = arith.constant 0 : index
    %c0_7 = arith.constant 0 : index
    %10 = vector.load %arg5[%c0_6, %c0_7] : memref<128x128xbf16, #tpu.memory_space<vmem>>, vector<128x128xbf16>
    %cst_8 = arith.constant dense<0.000000e+00> : vector<128x128xf32>
    %11 = tpu.matmul %9, %10, %cst_8 {dimension_numbers = #tpu.dot_dimension_numbers<[1], [0], [0], [1], [0, 0, 1, 1], [], []>} : vector<128x128xbf16>, vector<128x128xbf16>, vector<128x128xf32> -> vector<128x128xf32>
    %c0_9 = arith.constant 0 : index
    %c0_10 = arith.constant 0 : index
    %12 = vector.load %arg6[%c0_9, %c0_10] : memref<1x128xf32, #tpu.memory_space<vmem>>, vector<1x128xf32>
    %13 = vector.broadcast %12 : vector<1x128xf32> to vector<128x128xf32>
    %14 = arith.addf %11, %13 : vector<128x128xf32>
    %cst_11 = arith.constant 0.000000e+00 : f32
    %15 = vector.broadcast %cst_11 : f32 to vector<128x128xf32>
    %16 = arith.maximumf %14, %15 : vector<128x128xf32>
    %17 = arith.truncf %16 : vector<128x128xf32> to vector<128x128xbf16>
    %c0_12 = arith.constant 0 : index
    %c0_13 = arith.constant 0 : index
    %18 = vector.load %arg7[%c0_12, %c0_13] : memref<128x384xbf16, #tpu.memory_space<vmem>>, vector<128x384xbf16>
    %cst_14 = arith.constant dense<0.000000e+00> : vector<128x384xf32>
    %19 = tpu.matmul %17, %18, %cst_14 {dimension_numbers = #tpu.dot_dimension_numbers<[1], [0], [0], [1], [0, 0, 1, 1], [], []>} : vector<128x128xbf16>, vector<128x384xbf16>, vector<128x384xf32> -> vector<128x384xf32>
    %c0_15 = arith.constant 0 : index
    %c0_16 = arith.constant 0 : index
    %20 = vector.load %arg8[%c0_15, %c0_16] : memref<1x384xf32, #tpu.memory_space<vmem>>, vector<1x384xf32>
    %21 = vector.broadcast %20 : vector<1x384xf32> to vector<128x384xf32>
    %22 = arith.addf %19, %21 : vector<128x384xf32>
    %23 = vector.extract_strided_slice %22 {offsets = [0, 0], sizes = [128, 128], strides = [1, 1]} : vector<128x384xf32> to vector<128x128xf32>
    %24 = arith.negf %23 : vector<128x128xf32>
    %25 = math.exp %24 : vector<128x128xf32>
    %cst_17 = arith.constant 1.000000e+00 : f32
    %26 = vector.broadcast %cst_17 : f32 to vector<128x128xf32>
    %27 = arith.addf %26, %25 : vector<128x128xf32>
    %28 = arith.divf %26, %27 : vector<128x128xf32>
    %29 = vector.extract_strided_slice %22 {offsets = [0, 128], sizes = [128, 128], strides = [1, 1]} : vector<128x384xf32> to vector<128x128xf32>
    %30 = math.tanh %29 : vector<128x128xf32>
    %31 = vector.extract_strided_slice %22 {offsets = [0, 256], sizes = [128, 128], strides = [1, 1]} : vector<128x384xf32> to vector<128x128xf32>
    %32 = arith.negf %31 : vector<128x128xf32>
    %33 = math.exp %32 : vector<128x128xf32>
    %cst_18 = arith.constant 1.000000e+00 : f32
    %34 = vector.broadcast %cst_18 : f32 to vector<128x128xf32>
    %35 = arith.addf %34, %33 : vector<128x128xf32>
    %36 = arith.divf %34, %35 : vector<128x128xf32>
    %37 = arith.mulf %28, %30 : vector<128x128xf32>
    %38 = math.tanh %37 : vector<128x128xf32>
    %39 = arith.mulf %36, %38 : vector<128x128xf32>
    %cst_19 = arith.constant 0.000000e+00 : f32
    %40 = vector.broadcast %cst_19 : f32 to vector<128x128xf32>
    %41 = arith.maximumf %39, %40 : vector<128x128xf32>
    %42 = arith.truncf %41 : vector<128x128xf32> to vector<128x128xbf16>
    %c0_20 = arith.constant 0 : index
    %c0_21 = arith.constant 0 : index
    %43 = vector.load %arg9[%c0_20, %c0_21] : memref<128x128xbf16, #tpu.memory_space<vmem>>, vector<128x128xbf16>
    %cst_22 = arith.constant dense<0.000000e+00> : vector<128x128xf32>
    %44 = tpu.matmul %42, %43, %cst_22 {dimension_numbers = #tpu.dot_dimension_numbers<[1], [0], [0], [1], [0, 0, 1, 1], [], []>} : vector<128x128xbf16>, vector<128x128xbf16>, vector<128x128xf32> -> vector<128x128xf32>
    %c0_23 = arith.constant 0 : index
    %c0_24 = arith.constant 0 : index
    %45 = vector.load %arg10[%c0_23, %c0_24] : memref<1x128xf32, #tpu.memory_space<vmem>>, vector<1x128xf32>
    %46 = vector.broadcast %45 : vector<1x128xf32> to vector<128x128xf32>
    %47 = arith.addf %44, %46 : vector<128x128xf32>
    %c0_25 = arith.constant 0 : index
    %c0_26 = arith.constant 0 : index
    %48 = vector.load %arg11[%c0_25, %c0_26] : memref<128x128xf32, #tpu.memory_space<vmem>>, vector<128x128xf32>
    tpu.vector_store %arg11[%c0_25, %c0_26], %47 {strides = array<i32>} : memref<128x128xf32, #tpu.memory_space<vmem>>, vector<128x128xf32>,
    %c128_i32 = arith.constant 128 : i32
    %49 = arith.muli %arg0, %c128_i32 : i32
    %50 = tpu.iota {dimensions = array<i32: 0>} : vector<128x128xi32>
    %51 = vector.broadcast %49 : i32 to vector<128x128xi32>
    %52 = arith.addi %51, %50 : vector<128x128xi32>
    %c0_27 = arith.constant 0 : index
    %c0_28 = arith.constant 0 : index
    %53 = memref.load %arg1[%c0_27, %c0_28] : memref<1x1xi32, #tpu.memory_space<smem>>
    %54 = vector.broadcast %53 : i32 to vector<128x128xi32>
    %55 = arith.cmpi slt, %52, %54 : vector<128x128xi32>
    %cst_29 = arith.constant 0.000000e+00 : f32
    %56 = vector.broadcast %cst_29 : f32 to vector<128x128xf32>
    %57 = arith.select %55, %47, %56 : vector<128x128xi1>, vector<128x128xf32>
    %cst_30 = arith.constant dense<0.000000e+00> : vector<128xf32>
    %58 = vector.multi_reduction <add>, %57, %cst_30 [0] : vector<128x128xf32> to vector<128xf32>
    %59 = vector.shape_cast %58 : vector<128xf32> to vector<1x128xf32>
    %60 = vector.shape_cast %59 : vector<1x128xf32> to vector<1x128xf32>
    %61 = vector.broadcast %60 : vector<1x128xf32> to vector<8x128xf32>
    %c0_31 = arith.constant 0 : index
    %c0_32 = arith.constant 0 : index
    %62 = vector.load %arg12[%c0_31, %c0_32] : memref<8x128xf32, #tpu.memory_space<vmem>>, vector<8x128xf32>
    tpu.vector_store %arg12[%c0_31, %c0_32], %61 {strides = array<i32>} : memref<8x128xf32, #tpu.memory_space<vmem>>, vector<8x128xf32>,
    return
  }
  func.func @transform_0(%arg0: i32) -> (i32, i32) {
    %c0_i32 = arith.constant 0 : i32
    %c0_i32_0 = arith.constant 0 : i32
    %c0_i32_1 = arith.constant 0 : i32
    return %c0_i32, %c0_i32_0 : i32, i32
  }
  func.func @transform_1(%arg0: i32) -> (i32, i32) {
    %c0_i32 = arith.constant 0 : i32
    %c0_i32_0 = arith.constant 0 : i32
    return %arg0, %c0_i32 : i32, i32
  }
  func.func @transform_2(%arg0: i32) -> (i32, i32) {
    %c0_i32 = arith.constant 0 : i32
    %c0_i32_0 = arith.constant 0 : i32
    %c0_i32_1 = arith.constant 0 : i32
    return %c0_i32, %c0_i32_0 : i32, i32
  }
  func.func @transform_3(%arg0: i32) -> (i32, i32) {
    %c0_i32 = arith.constant 0 : i32
    %c0_i32_0 = arith.constant 0 : i32
    %c0_i32_1 = arith.constant 0 : i32
    return %c0_i32, %c0_i32_0 : i32, i32
  }
  func.func @transform_4(%arg0: i32) -> (i32, i32) {
    %c0_i32 = arith.constant 0 : i32
    %c0_i32_0 = arith.constant 0 : i32
    %c0_i32_1 = arith.constant 0 : i32
    return %c0_i32, %c0_i32_0 : i32, i32
  }
  func.func @transform_5(%arg0: i32) -> (i32, i32) {
    %c0_i32 = arith.constant 0 : i32
    %c0_i32_0 = arith.constant 0 : i32
    %c0_i32_1 = arith.constant 0 : i32
    return %c0_i32, %c0_i32_0 : i32, i32
  }
  func.func @transform_6(%arg0: i32) -> (i32, i32) {
    %c0_i32 = arith.constant 0 : i32
    %c0_i32_0 = arith.constant 0 : i32
    %c0_i32_1 = arith.constant 0 : i32
    return %c0_i32, %c0_i32_0 : i32, i32
  }
  func.func @transform_7(%arg0: i32) -> (i32, i32) {
    %c0_i32 = arith.constant 0 : i32
    %c0_i32_0 = arith.constant 0 : i32
    %c0_i32_1 = arith.constant 0 : i32
    return %c0_i32, %c0_i32_0 : i32, i32
  }
  func.func @transform_8(%arg0: i32) -> (i32, i32) {
    %c0_i32 = arith.constant 0 : i32
    %c0_i32_0 = arith.constant 0 : i32
    %c0_i32_1 = arith.constant 0 : i32
    return %c0_i32, %c0_i32_0 : i32, i32
  }
  func.func @transform_9(%arg0: i32) -> (i32, i32) {
    %c0_i32 = arith.constant 0 : i32
    %c0_i32_0 = arith.constant 0 : i32
    %c0_i32_1 = arith.constant 0 : i32
    return %c0_i32, %c0_i32_0 : i32, i32
  }
  func.func @transform_10(%arg0: i32) -> (i32, i32) {
    %c0_i32 = arith.constant 0 : i32
    %c0_i32_0 = arith.constant 0 : i32
    return %arg0, %c0_i32 : i32, i32
  }
  func.func @transform_11(%arg0: i32) -> (i32, i32) {
    %c0_i32 = arith.constant 0 : i32
    %c0_i32_0 = arith.constant 0 : i32
    return %arg0, %c0_i32 : i32, i32
  }
}

module attributes {stable_mosaic.version = 11 : i64} {
  func.func @_subtract_mean_kernel(%arg0: i32, %arg1: memref<1x1xf32, #tpu.memory_space<smem>>, %arg2: memref<128x128xf32, #tpu.memory_space<vmem>>, %arg3: memref<128x128xf32, #tpu.memory_space<vmem>>) attributes {dimension_semantics = [#tpu.dimension_semantics<parallel>], iteration_bounds = array<i64: 2>, scalar_prefetch = 0 : i64, scratch_operands = 0 : i64, tpu.core_type = #tpu.core_type<tc>, window_params = [{transform_indices = @transform_0, window_bounds = array<i64: 1, 1>}, {transform_indices = @transform_1, window_bounds = array<i64: 128, 128>}, {transform_indices = @transform_2, window_bounds = array<i64: 128, 128>}]} {
    %c0 = arith.constant 0 : index
    %c0_0 = arith.constant 0 : index
    %0 = vector.load %arg2[%c0, %c0_0] : memref<128x128xf32, #tpu.memory_space<vmem>>, vector<128x128xf32>
    %c0_1 = arith.constant 0 : index
    %c0_2 = arith.constant 0 : index
    %1 = memref.load %arg1[%c0_1, %c0_2] : memref<1x1xf32, #tpu.memory_space<smem>>
    %2 = vector.broadcast %1 : f32 to vector<128x128xf32>
    %3 = arith.subf %0, %2 : vector<128x128xf32>
    %c0_3 = arith.constant 0 : index
    %c0_4 = arith.constant 0 : index
    %4 = vector.load %arg3[%c0_3, %c0_4] : memref<128x128xf32, #tpu.memory_space<vmem>>, vector<128x128xf32>
    tpu.vector_store %arg3[%c0_3, %c0_4], %3 {strides = array<i32>} : memref<128x128xf32, #tpu.memory_space<vmem>>, vector<128x128xf32>,
    return
  }
  func.func @transform_0(%arg0: i32) -> (i32, i32) {
    %c0_i32 = arith.constant 0 : i32
    %c0_i32_0 = arith.constant 0 : i32
    %c0_i32_1 = arith.constant 0 : i32
    return %c0_i32, %c0_i32_0 : i32, i32
  }
  func.func @transform_1(%arg0: i32) -> (i32, i32) {
    %c0_i32 = arith.constant 0 : i32
    %c0_i32_0 = arith.constant 0 : i32
    return %arg0, %c0_i32 : i32, i32
  }
  func.func @transform_2(%arg0: i32) -> (i32, i32) {
    %c0_i32 = arith.constant 0 : i32
    %c0_i32_0 = arith.constant 0 : i32
    return %arg0, %c0_i32 : i32, i32
  }
}

</mosaic_0001>

<llo_original>
// kernel: neural_network_forward.3
$region0: #{neural_network_forward.3}
  #allocation0 [shape = 'u32[]', space=smem, size = 0x4, offset = 0x4, fixed_abs, tag = 'smem constant byte address 0x4 - core index']
  #allocation1 [shape = 'u32[144,128]{1,0:T(1,128)}', space=vmem, size = 0x12000, scoped, tag = 'internal scratch']
  #allocation2 [shape = 'f32[1,1]{1,0:T(1,128)S(6)}', space=smem, size = 0x200, scoped, tag = 'scoped memory for neural_network_forward.3']
  %s0 = inlined_call_operand.<no memory space> [shape: f32[1,1], index: 0, kind: input, shape index: {}]
  %s1 = inlined_call_operand.vmem [shape: f32[256,128], index: 1, kind: input, shape index: {}]
  %s2 = inlined_call_operand.vmem [shape: f32[256,128], index: 2, kind: output, shape index: {}]
  %s3 = sld [smem:[#allocation0]]
  $region41: #{neural_network_forward.3} parent=0
    _
  %s5 = ssub.s32 1, %s3
  %s6 = scalar_select 0, %s5, %s3
  %7 = sst [smem:[#allocation2]] %s0
  loop: start=0, step=1, limit=4
  $region2: #{neural_network_forward.3} parent=0 // loop_pre_header
    _
  $region3: #{neural_network_forward.3} parent=0 // loop_header
    %s9 = sphi 0, %s13
    %p10 = scmp.ge.s32.totalorder %s9, 4
    %s17 = sphi 0, %s17
    %s19 = sphi 0, %s17
    %s20 = sphi 0, %s19
    %s34 = sphi 0, %s20
    %s40 = sphi 0, %s42
    %s43 = sphi 0, %s40
    %s44 = sphi 0, %s43
    %s60 = sphi 0, %s44
    %s66 = sphi 0, %s68
    %s69 = sphi 0, %s66
    %s70 = sphi 0, %s69
    %s86 = sphi 0, %s70
  $region4: #{neural_network_forward.3} parent=0 // loop_header_branch
    %12 = sbr.rel (%p10) target = $region8
  $region5: #{neural_network_forward.3} parent=0 // loop_body
    %s14 = ssub.s32 %s9, 1
    %s15 = ssub.s32 %s9, 2
    %s16 = sadd.s32 %s9, 1
    %s18 = sadd.s32 %s17, 1
    %p21 = scmp.eq.s32.totalorder %s9, 1
    %p22 = scmp.ne.s32.totalorder %s17, %s19
    %p23 = scmp.eq.s32.totalorder %s9, 0
    %p24 = por %p22, %p23
    %p25 = scmp.ne.s32.totalorder %s17, %s19
    %p26 = scmp.eq.s32.totalorder %s14, 1
    %p27 = por %p25, %p26
    %p28 = scmp.ne.s32.totalorder %s19, %s20
    %p29 = scmp.eq.s32.totalorder %s14, 0
    %p30 = por %p28, %p29
    %p31 = scmp.ne.s32.totalorder %s19, %s20
    %p32 = scmp.eq.s32.totalorder %s15, 1
    %p33 = por %p31, %p32
    %p35 = scmp.ne.s32.totalorder %s20, %s34
    %p36 = scmp.eq.s32.totalorder %s15, 0
    %p37 = por %p35, %p36
    %s38 = ssub.s32 %s9, %s16
    %p39 = scmp.eq.s32.totalorder %s38, 0
    %s41 = sadd.s32 %s40, 1
    %s42 = scalar_select %p39, %s40, %s41
    %p45 = pneg %p39
    %p46 = scmp.eq.s32.totalorder %s9, 1
    %p47 = por %p45, %p46
    %p48 = scmp.ne.s32.totalorder %s40, %s43
    %p49 = scmp.eq.s32.totalorder %s9, 0
    %p50 = por %p48, %p49
    %p51 = scmp.ne.s32.totalorder %s40, %s43
    %p52 = scmp.eq.s32.totalorder %s14, 1
    %p53 = por %p51, %p52
    %p54 = scmp.ne.s32.totalorder %s43, %s44
    %p55 = scmp.eq.s32.totalorder %s14, 0
    %p56 = por %p54, %p55
    %p57 = scmp.ne.s32.totalorder %s43, %s44
    %p58 = scmp.eq.s32.totalorder %s15, 1
    %p59 = por %p57, %p58
    %p61 = scmp.ne.s32.totalorder %s44, %s60
    %p62 = scmp.eq.s32.totalorder %s15, 0
    %p63 = por %p61, %p62
    %s64 = ssub.s32 %s9, %s16
    %p65 = scmp.eq.s32.totalorder %s64, 0
    %s67 = sadd.s32 %s66, 1
    %s68 = scalar_select %p65, %s66, %s67
    %p71 = pneg %p65
    %p72 = scmp.eq.s32.totalorder %s9, 1
    %p73 = por %p71, %p72
    %p74 = scmp.ne.s32.totalorder %s66, %s69
    %p75 = scmp.eq.s32.totalorder %s9, 0
    %p76 = por %p74, %p75
    %p77 = scmp.ne.s32.totalorder %s66, %s69
    %p78 = scmp.eq.s32.totalorder %s14, 1
    %p79 = por %p77, %p78
    %p80 = scmp.ne.s32.totalorder %s69, %s70
    %p81 = scmp.eq.s32.totalorder %s14, 0
    %p82 = por %p80, %p81
    %p83 = scmp.ne.s32.totalorder %s69, %s70
    %p84 = scmp.eq.s32.totalorder %s15, 1
    %p85 = por %p83, %p84
    %p87 = scmp.ne.s32.totalorder %s70, %s86
    %p88 = scmp.eq.s32.totalorder %s15, 0
    %p89 = por %p87, %p88
    %p90 = scmp.le.s32.totalorder 1, %s9
    %p91 = scmp.lt.s32.totalorder %s9, 3
    %p92 = pnand %p90, %p91
    %p93 = pneg %p92
    // Predicated region
    $region9: #{neural_network_forward.3} parent=5 // pred_check
      _
    $region10: #{neural_network_forward.3} parent=5 // pred_check_branch
      %95 = sbr.rel (%p92) target = $region12
    $region11: #{neural_network_forward.3} parent=5 // pred_region
      %s96 = ssub.s32 %s9, 1
      // Predicated region
      $region13: #{neural_network_forward.3} parent=11 // pred_check
        %p97 = pneg %p30
      $region14: #{neural_network_forward.3} parent=11 // pred_check_branch
        %99 = sbr.rel (%p97) target = $region16
      $region15: #{neural_network_forward.3} parent=11 // pred_region
        _
      $region16: #{neural_network_forward.3} parent=11 // pred_fallthru
        _
    $region12: #{neural_network_forward.3} parent=5 // pred_fallthru
      _
    %p100 = scmp.lt.s32.totalorder %s9, 2
    // Predicated region
    $region17: #{neural_network_forward.3} parent=5 // pred_check
      %p101 = pneg %p100
    $region18: #{neural_network_forward.3} parent=5 // pred_check_branch
      %103 = sbr.rel (%p101) target = $region20
    $region19: #{neural_network_forward.3} parent=5 // pred_region
      // Predicated region
      $region21: #{neural_network_forward.3} parent=19 // pred_check
        %p104 = pneg %p50
      $region22: #{neural_network_forward.3} parent=19 // pred_check_branch
        %106 = sbr.rel (%p104) target = $region24
      $region23: #{neural_network_forward.3} parent=19 // pred_region
        %s107 = smul.u32 16, %s9
        %p108 = scmp.lt.s32.totalorder %s107, 31
        %s109 = scalar_select %p108, %s107, 31
        %s110 = smul.addr %s109, 8
        %s111 = scalar_lea.vmem %s1, %s110
        %s112 = smul.u32 16, %s9
      $region24: #{neural_network_forward.3} parent=19 // pred_fallthru
        _
    $region20: #{neural_network_forward.3} parent=5 // pred_fallthru
      _
    %p113 = scmp.le.s32.totalorder 1, %s9
    %p114 = scmp.lt.s32.totalorder %s9, 3
    %p115 = pnand %p113, %p114
    %p116 = pneg %p115
    // Predicated region
    $region25: #{neural_network_forward.3} parent=5 // pred_check
      _
    $region26: #{neural_network_forward.3} parent=5 // pred_check_branch
      %118 = sbr.rel (%p115) target = $region28
    $region27: #{neural_network_forward.3} parent=5 // pred_region
      %s119 = ssub.s32 %s9, 1
      %p120 = pneg %p30
      %p121 = pneg %p27
      %s122 = smul.u32 16, %s14
      %p123 = scmp.lt.s32.totalorder %s122, 31
      %s124 = scalar_select %p123, %s122, 31
      %s125 = smul.addr %s124, 8
      %s126 = scalar_lea.vmem %s1, %s125
      %p127 = pneg %p56
      %p128 = pneg %p53
      %p129 = pneg %p82
      %p130 = pneg %p79
      %s131 = smul.u32 16, %s14
      %p132 = scmp.lt.s32.totalorder %s131, 31
      %s133 = scalar_select %p132, %s131, 31
      %s134 = smul.addr %s133, 8
      %s135 = scalar_lea.vmem %s2, %s134
      %s136 = smul.u32 16, %s14
      %p137 = scmp.lt.s32.totalorder %s136, 31
      %s138 = scalar_select %p137, %s136, 31
      %s139 = smul.addr %s138, 8
      %s140 = scalar_lea.vmem %s1, %s139
      %s141 = smul.u32 16, %s14
      %s142 = smul.u32 16, %s14
      %p143 = scmp.lt.s32.totalorder %s142, 31
      %s144 = scalar_select %p143, %s142, 31
      %s145 = smul.addr %s144, 8
      %s146 = scalar_lea.vmem %s2, %s145
      %s147 = smul.u32 16, %s14
      %v148 = vld [vmem:[%s140] sm:$0xff]
      %v149 = vld [vmem:[%s140 + $0x8] sm:$0xff]
      %v150 = vld [vmem:[%s140 + $0x10] sm:$0xff]
      %v151 = vld [vmem:[%s140 + $0x18] sm:$0xff]
      %v152 = vld [vmem:[%s140 + $0x20] sm:$0xff]
      %v153 = vld [vmem:[%s140 + $0x28] sm:$0xff]
      %v154 = vld [vmem:[%s140 + $0x30] sm:$0xff]
      %v155 = vld [vmem:[%s140 + $0x38] sm:$0xff]
      %v156 = vld [vmem:[%s140 + $0x40] sm:$0xff]
      %v157 = vld [vmem:[%s140 + $0x48] sm:$0xff]
      %v158 = vld [vmem:[%s140 + $0x50] sm:$0xff]
      %v159 = vld [vmem:[%s140 + $0x58] sm:$0xff]
      %v160 = vld [vmem:[%s140 + $0x60] sm:$0xff]
      %v161 = vld [vmem:[%s140 + $0x68] sm:$0xff]
      %v162 = vld [vmem:[%s140 + $0x70] sm:$0xff]
      %v163 = vld [vmem:[%s140 + $0x78] sm:$0xff]
      %s164 = sld [smem:[#allocation2]]
      %v165 = vstv %s164
      %v166 = vsub.f32 %v148, %v165
      %v167 = vsub.f32 %v149, %v165
      %v168 = vsub.f32 %v150, %v165
      %v169 = vsub.f32 %v151, %v165
      %v170 = vsub.f32 %v152, %v165
      %v171 = vsub.f32 %v153, %v165
      %v172 = vsub.f32 %v154, %v165
      %v173 = vsub.f32 %v155, %v165
      %v174 = vsub.f32 %v156, %v165
      %v175 = vsub.f32 %v157, %v165
      %v176 = vsub.f32 %v158, %v165
      %v177 = vsub.f32 %v159, %v165
      %v178 = vsub.f32 %v160, %v165
      %v179 = vsub.f32 %v161, %v165
      %v180 = vsub.f32 %v162, %v165
      %v181 = vsub.f32 %v163, %v165
      %182 = vst [vmem:[%s146] sm:$0xff] %v166
      %183 = vst [vmem:[%s146 + $0x8] sm:$0xff] %v167
      %184 = vst [vmem:[%s146 + $0x10] sm:$0xff] %v168
      %185 = vst [vmem:[%s146 + $0x18] sm:$0xff] %v169
      %186 = vst [vmem:[%s146 + $0x20] sm:$0xff] %v170
      %187 = vst [vmem:[%s146 + $0x28] sm:$0xff] %v171
      %188 = vst [vmem:[%s146 + $0x30] sm:$0xff] %v172
      %189 = vst [vmem:[%s146 + $0x38] sm:$0xff] %v173
      %190 = vst [vmem:[%s146 + $0x40] sm:$0xff] %v174
      %191 = vst [vmem:[%s146 + $0x48] sm:$0xff] %v175
      %192 = vst [vmem:[%s146 + $0x50] sm:$0xff] %v176
      %193 = vst [vmem:[%s146 + $0x58] sm:$0xff] %v177
      %194 = vst [vmem:[%s146 + $0x60] sm:$0xff] %v178
      %195 = vst [vmem:[%s146 + $0x68] sm:$0xff] %v179
      %196 = vst [vmem:[%s146 + $0x70] sm:$0xff] %v180
      %197 = vst [vmem:[%s146 + $0x78] sm:$0xff] %v181
      %s198 = smul.u32 16, %s14
      %p199 = scmp.lt.s32.totalorder %s198, 31
      %s200 = scalar_select %p199, %s198, 31
      %s201 = smul.addr %s200, 8
      %s202 = scalar_lea.vmem %s2, %s201
      // Predicated region
      $region29: #{neural_network_forward.3} parent=27 // pred_check
        %p203 = pneg %p79
      $region30: #{neural_network_forward.3} parent=27 // pred_check_branch
        %205 = sbr.rel (%p203) target = $region32
      $region31: #{neural_network_forward.3} parent=27 // pred_region
        %s206 = smul.u32 16, %s14
      $region32: #{neural_network_forward.3} parent=27 // pred_fallthru
        _
    $region28: #{neural_network_forward.3} parent=5 // pred_fallthru
      _
    %p207 = scmp.le.s32.totalorder 2, %s9
    // Predicated region
    $region33: #{neural_network_forward.3} parent=5 // pred_check
      %p208 = pneg %p207
    $region34: #{neural_network_forward.3} parent=5 // pred_check_branch
      %210 = sbr.rel (%p208) target = $region36
    $region35: #{neural_network_forward.3} parent=5 // pred_region
      %s211 = ssub.s32 %s9, 2
      // Predicated region
      $region37: #{neural_network_forward.3} parent=35 // pred_check
        %p212 = pneg %p85
      $region38: #{neural_network_forward.3} parent=35 // pred_check_branch
        %214 = sbr.rel (%p212) target = $region40
      $region39: #{neural_network_forward.3} parent=35 // pred_region
        %s215 = smul.u32 16, %s15
        %p216 = scmp.lt.s32.totalorder %s215, 31
        %s217 = scalar_select %p216, %s215, 31
        %s218 = smul.addr %s217, 8
        %s219 = scalar_lea.vmem %s2, %s218
      $region40: #{neural_network_forward.3} parent=35 // pred_fallthru
        _
    $region36: #{neural_network_forward.3} parent=5 // pred_fallthru
      _
  $region6: #{neural_network_forward.3} parent=0 // loop_footer
    %s13 = sadd.s32 1, %s9
  $region7: #{neural_network_forward.3} parent=0 // loop_footer_branch
    %8 = sbr.rel target = $region3
  $region8: #{neural_network_forward.3} parent=0 // loop_exit
    _

// kernel: neural_network_forward.2
$region0: #{neural_network_forward.2}
  #allocation0 [shape = 'u32[]', space=smem, size = 0x4, offset = 0x4, fixed_abs, tag = 'smem constant byte address 0x4 - core index']
  #allocation1 [shape = 'u32[144,128]{1,0:T(1,128)}', space=vmem, size = 0x12000, scoped, tag = 'internal scratch']
  #allocation2 [shape = 's32[1,1]{1,0:T(1,128)S(6)}', space=smem, size = 0x200, scoped, tag = 'scoped memory for neural_network_forward.2']
  %s0 = inlined_call_operand.<no memory space> [shape: s32[1,1], index: 0, kind: input, shape index: {}]
  %s1 = inlined_call_operand.vmem [shape: f32[256,128], index: 1, kind: input, shape index: {}]
  %s2 = inlined_call_operand.vmem [shape: bf16[128,128], index: 2, kind: input, shape index: {}]
  %s3 = inlined_call_operand.vmem [shape: f32[1,128], index: 3, kind: input, shape index: {}]
  %s4 = inlined_call_operand.vmem [shape: bf16[128,128], index: 4, kind: input, shape index: {}]
  %s5 = inlined_call_operand.vmem [shape: f32[1,128], index: 5, kind: input, shape index: {}]
  %s6 = inlined_call_operand.vmem [shape: bf16[128,384], index: 6, kind: input, shape index: {}]
  %s7 = inlined_call_operand.vmem [shape: f32[1,384], index: 7, kind: input, shape index: {}]
  %s8 = inlined_call_operand.vmem [shape: bf16[128,128], index: 8, kind: input, shape index: {}]
  %s9 = inlined_call_operand.vmem [shape: f32[1,128], index: 9, kind: input, shape index: {}]
  %s10 = inlined_call_operand.vmem [shape: f32[256,128], index: 10, kind: output, shape index: {0}]
  %s11 = inlined_call_operand.vmem [shape: f32[16,128], index: 11, kind: output, shape index: {1}]
  %12 = xla_tuple %s10, %s11
  %s13 = sld [smem:[#allocation0]]
  $region81: #{neural_network_forward.2} parent=0
    _
  %s15 = ssub.s32 1, %s13
  %s16 = scalar_select 0, %s15, %s13
  %17 = sst [smem:[#allocation2]] %s0
  loop: start=0, step=1, limit=4
  $region2: #{neural_network_forward.2} parent=0 // loop_pre_header
    _
  $region3: #{neural_network_forward.2} parent=0 // loop_header
    %s19 = sphi 0, %s23
    %p20 = scmp.ge.s32.totalorder %s19, 4
    %s27 = sphi 0, %s27
    %s29 = sphi 0, %s27
    %s30 = sphi 0, %s29
    %s44 = sphi 0, %s30
    %s50 = sphi 0, %s52
    %s53 = sphi 0, %s50
    %s54 = sphi 0, %s53
    %s70 = sphi 0, %s54
    %s74 = sphi 0, %s74
    %s76 = sphi 0, %s74
    %s77 = sphi 0, %s76
    %s91 = sphi 0, %s77
    %s95 = sphi 0, %s95
    %s97 = sphi 0, %s95
    %s98 = sphi 0, %s97
    %s112 = sphi 0, %s98
    %s116 = sphi 0, %s116
    %s118 = sphi 0, %s116
    %s119 = sphi 0, %s118
    %s133 = sphi 0, %s119
    %s137 = sphi 0, %s137
    %s139 = sphi 0, %s137
    %s140 = sphi 0, %s139
    %s154 = sphi 0, %s140
    %s158 = sphi 0, %s158
    %s160 = sphi 0, %s158
    %s161 = sphi 0, %s160
    %s175 = sphi 0, %s161
    %s179 = sphi 0, %s179
    %s181 = sphi 0, %s179
    %s182 = sphi 0, %s181
    %s196 = sphi 0, %s182
    %s200 = sphi 0, %s200
    %s202 = sphi 0, %s200
    %s203 = sphi 0, %s202
    %s217 = sphi 0, %s203
    %s221 = sphi 0, %s221
    %s223 = sphi 0, %s221
    %s224 = sphi 0, %s223
    %s238 = sphi 0, %s224
    %s244 = sphi 0, %s246
    %s247 = sphi 0, %s244
    %s248 = sphi 0, %s247
    %s264 = sphi 0, %s248
    %s270 = sphi 0, %s272
    %s273 = sphi 0, %s270
    %s274 = sphi 0, %s273
    %s290 = sphi 0, %s274
  $region4: #{neural_network_forward.2} parent=0 // loop_header_branch
    %22 = sbr.rel (%p20) target = $region8
  $region5: #{neural_network_forward.2} parent=0 // loop_body
    %s24 = ssub.s32 %s19, 1
    %s25 = ssub.s32 %s19, 2
    %s26 = sadd.s32 %s19, 1
    %s28 = sadd.s32 %s27, 1
    %p31 = scmp.eq.s32.totalorder %s19, 1
    %p32 = scmp.ne.s32.totalorder %s27, %s29
    %p33 = scmp.eq.s32.totalorder %s19, 0
    %p34 = por %p32, %p33
    %p35 = scmp.ne.s32.totalorder %s27, %s29
    %p36 = scmp.eq.s32.totalorder %s24, 1
    %p37 = por %p35, %p36
    %p38 = scmp.ne.s32.totalorder %s29, %s30
    %p39 = scmp.eq.s32.totalorder %s24, 0
    %p40 = por %p38, %p39
    %p41 = scmp.ne.s32.totalorder %s29, %s30
    %p42 = scmp.eq.s32.totalorder %s25, 1
    %p43 = por %p41, %p42
    %p45 = scmp.ne.s32.totalorder %s30, %s44
    %p46 = scmp.eq.s32.totalorder %s25, 0
    %p47 = por %p45, %p46
    %s48 = ssub.s32 %s19, %s26
    %p49 = scmp.eq.s32.totalorder %s48, 0
    %s51 = sadd.s32 %s50, 1
    %s52 = scalar_select %p49, %s50, %s51
    %p55 = pneg %p49
    %p56 = scmp.eq.s32.totalorder %s19, 1
    %p57 = por %p55, %p56
    %p58 = scmp.ne.s32.totalorder %s50, %s53
    %p59 = scmp.eq.s32.totalorder %s19, 0
    %p60 = por %p58, %p59
    %p61 = scmp.ne.s32.totalorder %s50, %s53
    %p62 = scmp.eq.s32.totalorder %s24, 1
    %p63 = por %p61, %p62
    %p64 = scmp.ne.s32.totalorder %s53, %s54
    %p65 = scmp.eq.s32.totalorder %s24, 0
    %p66 = por %p64, %p65
    %p67 = scmp.ne.s32.totalorder %s53, %s54
    %p68 = scmp.eq.s32.totalorder %s25, 1
    %p69 = por %p67, %p68
    %p71 = scmp.ne.s32.totalorder %s54, %s70
    %p72 = scmp.eq.s32.totalorder %s25, 0
    %p73 = por %p71, %p72
    %s75 = sadd.s32 %s74, 1
    %p78 = scmp.eq.s32.totalorder %s19, 1
    %p79 = scmp.ne.s32.totalorder %s74, %s76
    %p80 = scmp.eq.s32.totalorder %s19, 0
    %p81 = por %p79, %p80
    %p82 = scmp.ne.s32.totalorder %s74, %s76
    %p83 = scmp.eq.s32.totalorder %s24, 1
    %p84 = por %p82, %p83
    %p85 = scmp.ne.s32.totalorder %s76, %s77
    %p86 = scmp.eq.s32.totalorder %s24, 0
    %p87 = por %p85, %p86
    %p88 = scmp.ne.s32.totalorder %s76, %s77
    %p89 = scmp.eq.s32.totalorder %s25, 1
    %p90 = por %p88, %p89
    %p92 = scmp.ne.s32.totalorder %s77, %s91
    %p93 = scmp.eq.s32.totalorder %s25, 0
    %p94 = por %p92, %p93
    %s96 = sadd.s32 %s95, 1
    %p99 = scmp.eq.s32.totalorder %s19, 1
    %p100 = scmp.ne.s32.totalorder %s95, %s97
    %p101 = scmp.eq.s32.totalorder %s19, 0
    %p102 = por %p100, %p101
    %p103 = scmp.ne.s32.totalorder %s95, %s97
    %p104 = scmp.eq.s32.totalorder %s24, 1
    %p105 = por %p103, %p104
    %p106 = scmp.ne.s32.totalorder %s97, %s98
    %p107 = scmp.eq.s32.totalorder %s24, 0
    %p108 = por %p106, %p107
    %p109 = scmp.ne.s32.totalorder %s97, %s98
    %p110 = scmp.eq.s32.totalorder %s25, 1
    %p111 = por %p109, %p110
    %p113 = scmp.ne.s32.totalorder %s98, %s112
    %p114 = scmp.eq.s32.totalorder %s25, 0
    %p115 = por %p113, %p114
    %s117 = sadd.s32 %s116, 1
    %p120 = scmp.eq.s32.totalorder %s19, 1
    %p121 = scmp.ne.s32.totalorder %s116, %s118
    %p122 = scmp.eq.s32.totalorder %s19, 0
    %p123 = por %p121, %p122
    %p124 = scmp.ne.s32.totalorder %s116, %s118
    %p125 = scmp.eq.s32.totalorder %s24, 1
    %p126 = por %p124, %p125
    %p127 = scmp.ne.s32.totalorder %s118, %s119
    %p128 = scmp.eq.s32.totalorder %s24, 0
    %p129 = por %p127, %p128
    %p130 = scmp.ne.s32.totalorder %s118, %s119
    %p131 = scmp.eq.s32.totalorder %s25, 1
    %p132 = por %p130, %p131
    %p134 = scmp.ne.s32.totalorder %s119, %s133
    %p135 = scmp.eq.s32.totalorder %s25, 0
    %p136 = por %p134, %p135
    %s138 = sadd.s32 %s137, 1
    %p141 = scmp.eq.s32.totalorder %s19, 1
    %p142 = scmp.ne.s32.totalorder %s137, %s139
    %p143 = scmp.eq.s32.totalorder %s19, 0
    %p144 = por %p142, %p143
    %p145 = scmp.ne.s32.totalorder %s137, %s139
    %p146 = scmp.eq.s32.totalorder %s24, 1
    %p147 = por %p145, %p146
    %p148 = scmp.ne.s32.totalorder %s139, %s140
    %p149 = scmp.eq.s32.totalorder %s24, 0
    %p150 = por %p148, %p149
    %p151 = scmp.ne.s32.totalorder %s139, %s140
    %p152 = scmp.eq.s32.totalorder %s25, 1
    %p153 = por %p151, %p152
    %p155 = scmp.ne.s32.totalorder %s140, %s154
    %p156 = scmp.eq.s32.totalorder %s25, 0
    %p157 = por %p155, %p156
    %s159 = sadd.s32 %s158, 1
    %p162 = scmp.eq.s32.totalorder %s19, 1
    %p163 = scmp.ne.s32.totalorder %s158, %s160
    %p164 = scmp.eq.s32.totalorder %s19, 0
    %p165 = por %p163, %p164
    %p166 = scmp.ne.s32.totalorder %s158, %s160
    %p167 = scmp.eq.s32.totalorder %s24, 1
    %p168 = por %p166, %p167
    %p169 = scmp.ne.s32.totalorder %s160, %s161
    %p170 = scmp.eq.s32.totalorder %s24, 0
    %p171 = por %p169, %p170
    %p172 = scmp.ne.s32.totalorder %s160, %s161
    %p173 = scmp.eq.s32.totalorder %s25, 1
    %p174 = por %p172, %p173
    %p176 = scmp.ne.s32.totalorder %s161, %s175
    %p177 = scmp.eq.s32.totalorder %s25, 0
    %p178 = por %p176, %p177
    %s180 = sadd.s32 %s179, 1
    %p183 = scmp.eq.s32.totalorder %s19, 1
    %p184 = scmp.ne.s32.totalorder %s179, %s181
    %p185 = scmp.eq.s32.totalorder %s19, 0
    %p186 = por %p184, %p185
    %p187 = scmp.ne.s32.totalorder %s179, %s181
    %p188 = scmp.eq.s32.totalorder %s24, 1
    %p189 = por %p187, %p188
    %p190 = scmp.ne.s32.totalorder %s181, %s182
    %p191 = scmp.eq.s32.totalorder %s24, 0
    %p192 = por %p190, %p191
    %p193 = scmp.ne.s32.totalorder %s181, %s182
    %p194 = scmp.eq.s32.totalorder %s25, 1
    %p195 = por %p193, %p194
    %p197 = scmp.ne.s32.totalorder %s182, %s196
    %p198 = scmp.eq.s32.totalorder %s25, 0
    %p199 = por %p197, %p198
    %s201 = sadd.s32 %s200, 1
    %p204 = scmp.eq.s32.totalorder %s19, 1
    %p205 = scmp.ne.s32.totalorder %s200, %s202
    %p206 = scmp.eq.s32.totalorder %s19, 0
    %p207 = por %p205, %p206
    %p208 = scmp.ne.s32.totalorder %s200, %s202
    %p209 = scmp.eq.s32.totalorder %s24, 1
    %p210 = por %p208, %p209
    %p211 = scmp.ne.s32.totalorder %s202, %s203
    %p212 = scmp.eq.s32.totalorder %s24, 0
    %p213 = por %p211, %p212
    %p214 = scmp.ne.s32.totalorder %s202, %s203
    %p215 = scmp.eq.s32.totalorder %s25, 1
    %p216 = por %p214, %p215
    %p218 = scmp.ne.s32.totalorder %s203, %s217
    %p219 = scmp.eq.s32.totalorder %s25, 0
    %p220 = por %p218, %p219
    %s222 = sadd.s32 %s221, 1
    %p225 = scmp.eq.s32.totalorder %s19, 1
    %p226 = scmp.ne.s32.totalorder %s221, %s223
    %p227 = scmp.eq.s32.totalorder %s19, 0
    %p228 = por %p226, %p227
    %p229 = scmp.ne.s32.totalorder %s221, %s223
    %p230 = scmp.eq.s32.totalorder %s24, 1
    %p231 = por %p229, %p230
    %p232 = scmp.ne.s32.totalorder %s223, %s224
    %p233 = scmp.eq.s32.totalorder %s24, 0
    %p234 = por %p232, %p233
    %p235 = scmp.ne.s32.totalorder %s223, %s224
    %p236 = scmp.eq.s32.totalorder %s25, 1
    %p237 = por %p235, %p236
    %p239 = scmp.ne.s32.totalorder %s224, %s238
    %p240 = scmp.eq.s32.totalorder %s25, 0
    %p241 = por %p239, %p240
    %s242 = ssub.s32 %s19, %s26
    %p243 = scmp.eq.s32.totalorder %s242, 0
    %s245 = sadd.s32 %s244, 1
    %s246 = scalar_select %p243, %s244, %s245
    %p249 = pneg %p243
    %p250 = scmp.eq.s32.totalorder %s19, 1
    %p251 = por %p249, %p250
    %p252 = scmp.ne.s32.totalorder %s244, %s247
    %p253 = scmp.eq.s32.totalorder %s19, 0
    %p254 = por %p252, %p253
    %p255 = scmp.ne.s32.totalorder %s244, %s247
    %p256 = scmp.eq.s32.totalorder %s24, 1
    %p257 = por %p255, %p256
    %p258 = scmp.ne.s32.totalorder %s247, %s248
    %p259 = scmp.eq.s32.totalorder %s24, 0
    %p260 = por %p258, %p259
    %p261 = scmp.ne.s32.totalorder %s247, %s248
    %p262 = scmp.eq.s32.totalorder %s25, 1
    %p263 = por %p261, %p262
    %p265 = scmp.ne.s32.totalorder %s248, %s264
    %p266 = scmp.eq.s32.totalorder %s25, 0
    %p267 = por %p265, %p266
    %s268 = ssub.s32 %s19, %s26
    %p269 = scmp.eq.s32.totalorder %s268, 0
    %s271 = sadd.s32 %s270, 1
    %s272 = scalar_select %p269, %s270, %s271
    %p275 = pneg %p269
    %p276 = scmp.eq.s32.totalorder %s19, 1
    %p277 = por %p275, %p276
    %p278 = scmp.ne.s32.totalorder %s270, %s273
    %p279 = scmp.eq.s32.totalorder %s19, 0
    %p280 = por %p278, %p279
    %p281 = scmp.ne.s32.totalorder %s270, %s273
    %p282 = scmp.eq.s32.totalorder %s24, 1
    %p283 = por %p281, %p282
    %p284 = scmp.ne.s32.totalorder %s273, %s274
    %p285 = scmp.eq.s32.totalorder %s24, 0
    %p286 = por %p284, %p285
    %p287 = scmp.ne.s32.totalorder %s273, %s274
    %p288 = scmp.eq.s32.totalorder %s25, 1
    %p289 = por %p287, %p288
    %p291 = scmp.ne.s32.totalorder %s274, %s290
    %p292 = scmp.eq.s32.totalorder %s25, 0
    %p293 = por %p291, %p292
    %p294 = scmp.le.s32.totalorder 1, %s19
    %p295 = scmp.lt.s32.totalorder %s19, 3
    %p296 = pnand %p294, %p295
    %p297 = pneg %p296
    // Predicated region
    $region9: #{neural_network_forward.2} parent=5 // pred_check
      _
    $region10: #{neural_network_forward.2} parent=5 // pred_check_branch
      %299 = sbr.rel (%p296) target = $region12
    $region11: #{neural_network_forward.2} parent=5 // pred_region
      %s300 = ssub.s32 %s19, 1
      // Predicated region
      $region13: #{neural_network_forward.2} parent=11 // pred_check
        %p301 = pneg %p40
      $region14: #{neural_network_forward.2} parent=11 // pred_check_branch
        %303 = sbr.rel (%p301) target = $region16
      $region15: #{neural_network_forward.2} parent=11 // pred_region
        _
      $region16: #{neural_network_forward.2} parent=11 // pred_fallthru
        _
      // Predicated region
      $region17: #{neural_network_forward.2} parent=11 // pred_check
        %p304 = pneg %p87
      $region18: #{neural_network_forward.2} parent=11 // pred_check_branch
        %306 = sbr.rel (%p304) target = $region20
      $region19: #{neural_network_forward.2} parent=11 // pred_region
        _
      $region20: #{neural_network_forward.2} parent=11 // pred_fallthru
        _
      // Predicated region
      $region21: #{neural_network_forward.2} parent=11 // pred_check
        %p307 = pneg %p108
      $region22: #{neural_network_forward.2} parent=11 // pred_check_branch
        %309 = sbr.rel (%p307) target = $region24
      $region23: #{neural_network_forward.2} parent=11 // pred_region
        _
      $region24: #{neural_network_forward.2} parent=11 // pred_fallthru
        _
      // Predicated region
      $region25: #{neural_network_forward.2} parent=11 // pred_check
        %p310 = pneg %p129
      $region26: #{neural_network_forward.2} parent=11 // pred_check_branch
        %312 = sbr.rel (%p310) target = $region28
      $region27: #{neural_network_forward.2} parent=11 // pred_region
        _
      $region28: #{neural_network_forward.2} parent=11 // pred_fallthru
        _
      // Predicated region
      $region29: #{neural_network_forward.2} parent=11 // pred_check
        %p313 = pneg %p150
      $region30: #{neural_network_forward.2} parent=11 // pred_check_branch
        %315 = sbr.rel (%p313) target = $region32
      $region31: #{neural_network_forward.2} parent=11 // pred_region
        _
      $region32: #{neural_network_forward.2} parent=11 // pred_fallthru
        _
      // Predicated region
      $region33: #{neural_network_forward.2} parent=11 // pred_check
        %p316 = pneg %p171
      $region34: #{neural_network_forward.2} parent=11 // pred_check_branch
        %318 = sbr.rel (%p316) target = $region36
      $region35: #{neural_network_forward.2} parent=11 // pred_region
        _
      $region36: #{neural_network_forward.2} parent=11 // pred_fallthru
        _
      // Predicated region
      $region37: #{neural_network_forward.2} parent=11 // pred_check
        %p319 = pneg %p192
      $region38: #{neural_network_forward.2} parent=11 // pred_check_branch
        %321 = sbr.rel (%p319) target = $region40
      $region39: #{neural_network_forward.2} parent=11 // pred_region
        _
      $region40: #{neural_network_forward.2} parent=11 // pred_fallthru
        _
      // Predicated region
      $region41: #{neural_network_forward.2} parent=11 // pred_check
        %p322 = pneg %p213
      $region42: #{neural_network_forward.2} parent=11 // pred_check_branch
        %324 = sbr.rel (%p322) target = $region44
      $region43: #{neural_network_forward.2} parent=11 // pred_region
        _
      $region44: #{neural_network_forward.2} parent=11 // pred_fallthru
        _
      // Predicated region
      $region45: #{neural_network_forward.2} parent=11 // pred_check
        %p325 = pneg %p234
      $region46: #{neural_network_forward.2} parent=11 // pred_check_branch
        %327 = sbr.rel (%p325) target = $region48
      $region47: #{neural_network_forward.2} parent=11 // pred_region
        _
      $region48: #{neural_network_forward.2} parent=11 // pred_fallthru
        _
    $region12: #{neural_network_forward.2} parent=5 // pred_fallthru
      _
    %p328 = scmp.lt.s32.totalorder %s19, 2
    // Predicated region
    $region49: #{neural_network_forward.2} parent=5 // pred_check
      %p329 = pneg %p328
    $region50: #{neural_network_forward.2} parent=5 // pred_check_branch
      %331 = sbr.rel (%p329) target = $region52
    $region51: #{neural_network_forward.2} parent=5 // pred_region
      // Predicated region
      $region53: #{neural_network_forward.2} parent=51 // pred_check
        %p332 = pneg %p60
      $region54: #{neural_network_forward.2} parent=51 // pred_check_branch
        %334 = sbr.rel (%p332) target = $region56
      $region55: #{neural_network_forward.2} parent=51 // pred_region
        %s335 = smul.u32 16, %s19
        %p336 = scmp.lt.s32.totalorder %s335, 31
        %s337 = scalar_select %p336, %s335, 31
        %s338 = smul.addr %s337, 8
        %s339 = scalar_lea.vmem %s1, %s338
        %s340 = smul.u32 16, %s19
      $region56: #{neural_network_forward.2} parent=51 // pred_fallthru
        _
    $region52: #{neural_network_forward.2} parent=5 // pred_fallthru
      _
    %p341 = scmp.le.s32.totalorder 1, %s19
    %p342 = scmp.lt.s32.totalorder %s19, 3
    %p343 = pnand %p341, %p342
    %p344 = pneg %p343
    // Predicated region
    $region57: #{neural_network_forward.2} parent=5 // pred_check
      _
    $region58: #{neural_network_forward.2} parent=5 // pred_check_branch
      %346 = sbr.rel (%p343) target = $region60
    $region59: #{neural_network_forward.2} parent=5 // pred_region
      %s347 = ssub.s32 %s19, 1
      %p348 = pneg %p40
      %p349 = pneg %p37
      %s350 = smul.u32 16, %s24
      %p351 = scmp.lt.s32.totalorder %s350, 31
      %s352 = scalar_select %p351, %s350, 31
      %s353 = smul.addr %s352, 8
      %s354 = scalar_lea.vmem %s1, %s353
      %p355 = pneg %p66
      %p356 = pneg %p63
      %p357 = pneg %p87
      %p358 = pneg %p84
      %p359 = pneg %p108
      %p360 = pneg %p105
      %p361 = pneg %p129
      %p362 = pneg %p126
      %p363 = pneg %p150
      %p364 = pneg %p147
      %p365 = pneg %p171
      %p366 = pneg %p168
      %p367 = pneg %p192
      %p368 = pneg %p189
      %p369 = pneg %p213
      %p370 = pneg %p210
      %p371 = pneg %p234
      %p372 = pneg %p231
      %p373 = pneg %p260
      %p374 = pneg %p257
      %s375 = smul.u32 16, %s24
      %p376 = scmp.lt.s32.totalorder %s375, 31
      %s377 = scalar_select %p376, %s375, 31
      %s378 = smul.addr %s377, 8
      %s379 = scalar_lea.vmem %s10, %s378
      %p380 = pneg %p286
      %p381 = pneg %p283
      %p382 = scmp.lt.s32.totalorder %s24, 1
      %s383 = scalar_select %p382, %s24, 1
      %s384 = smul.addr %s383, 8
      %s385 = scalar_lea.vmem %s11, %s384
      %s386 = smul.u32 16, %s24
      %p387 = scmp.lt.s32.totalorder %s386, 31
      %s388 = scalar_select %p387, %s386, 31
      %s389 = smul.addr %s388, 8
      %s390 = scalar_lea.vmem %s1, %s389
      %s391 = smul.u32 16, %s24
      %s392 = smul.u32 16, %s24
      %p393 = scmp.lt.s32.totalorder %s392, 31
      %s394 = scalar_select %p393, %s392, 31
      %s395 = smul.addr %s394, 8
      %s396 = scalar_lea.vmem %s10, %s395
      %s397 = smul.u32 16, %s24
      %p398 = scmp.lt.s32.totalorder %s24, 1
      %s399 = scalar_select %p398, %s24, 1
      %s400 = smul.addr %s399, 8
      %s401 = scalar_lea.vmem %s11, %s400
      %v403 = vld [vmem:[%s390] sm:$0xff]
      %v404 = vld [vmem:[%s390 + $0x8] sm:$0xff]
      %v405 = vld [vmem:[%s390 + $0x10] sm:$0xff]
      %v406 = vld [vmem:[%s390 + $0x18] sm:$0xff]
      %v407 = vld [vmem:[%s390 + $0x20] sm:$0xff]
      %v408 = vld [vmem:[%s390 + $0x28] sm:$0xff]
      %v409 = vld [vmem:[%s390 + $0x30] sm:$0xff]
      %v410 = vld [vmem:[%s390 + $0x38] sm:$0xff]
      %v411 = vld [vmem:[%s390 + $0x40] sm:$0xff]
      %v412 = vld [vmem:[%s390 + $0x48] sm:$0xff]
      %v413 = vld [vmem:[%s390 + $0x50] sm:$0xff]
      %v414 = vld [vmem:[%s390 + $0x58] sm:$0xff]
      %v415 = vld [vmem:[%s390 + $0x60] sm:$0xff]
      %v416 = vld [vmem:[%s390 + $0x68] sm:$0xff]
      %v417 = vld [vmem:[%s390 + $0x70] sm:$0xff]
      %v418 = vld [vmem:[%s390 + $0x78] sm:$0xff]
      %v419 = vpack.c.bf16 %v404, %v403
      %v420 = vpack.c.bf16 %v406, %v405
      %v421 = vpack.c.bf16 %v408, %v407
      %v422 = vpack.c.bf16 %v410, %v409
      %v423 = vpack.c.bf16 %v412, %v411
      %v424 = vpack.c.bf16 %v414, %v413
      %v425 = vpack.c.bf16 %v416, %v415
      %v426 = vpack.c.bf16 %v418, %v417
      %v427 = vld [vmem:[%s2] sm:$0xf]
      %v428 = vld [vmem:[%s2 + $0x4] sm:$0xf]
      %v429 = vld [vmem:[%s2 + $0x8] sm:$0xf]
      %v430 = vld [vmem:[%s2 + $0xc] sm:$0xf]
      %v431 = vld [vmem:[%s2 + $0x10] sm:$0xf]
      %v432 = vld [vmem:[%s2 + $0x14] sm:$0xf]
      %v433 = vld [vmem:[%s2 + $0x18] sm:$0xf]
      %v434 = vld [vmem:[%s2 + $0x1c] sm:$0xf]
      %v435 = vld [vmem:[%s2 + $0x20] sm:$0xf]
      %v436 = vld [vmem:[%s2 + $0x24] sm:$0xf]
      %v437 = vld [vmem:[%s2 + $0x28] sm:$0xf]
      %v438 = vld [vmem:[%s2 + $0x2c] sm:$0xf]
      %v439 = vld [vmem:[%s2 + $0x30] sm:$0xf]
      %v440 = vld [vmem:[%s2 + $0x34] sm:$0xf]
      %v441 = vld [vmem:[%s2 + $0x38] sm:$0xf]
      %v442 = vld [vmem:[%s2 + $0x3c] sm:$0xf]
      %v443 = vld [vmem:[%s3] sm:$0x1]
      %v445 = vlaneseq
      %v446 = vshrl.u32 %v445, 7
      %v447 = vsub.s32 0, %v446
      %v448 = vrot.slane %v443, %v447
      %v466 = vunpack.c.l.b16 %v427
      %v467 = vunpack.c.l.b16 %v428
      %v468 = vunpack.c.l.b16 %v429
      %v469 = vunpack.c.l.b16 %v430
      %v470 = vunpack.c.l.b16 %v431
      %v471 = vunpack.c.l.b16 %v432
      %v472 = vunpack.c.l.b16 %v433
      %v473 = vunpack.c.l.b16 %v434
      %v474 = vunpack.c.l.b16 %v435
      %v475 = vunpack.c.l.b16 %v436
      %v476 = vunpack.c.l.b16 %v437
      %v477 = vunpack.c.l.b16 %v438
      %v478 = vunpack.c.l.b16 %v439
      %v479 = vunpack.c.l.b16 %v440
      %v480 = vunpack.c.l.b16 %v441
      %v481 = vunpack.c.l.b16 %v442
      %v482 = vpack.c.b16 %v467, %v466
      %v483 = vpack.c.b16 %v469, %v468
      %v484 = vpack.c.b16 %v471, %v470
      %v485 = vpack.c.b16 %v473, %v472
      %v486 = vpack.c.b16 %v475, %v474
      %v487 = vpack.c.b16 %v477, %v476
      %v488 = vpack.c.b16 %v479, %v478
      %v489 = vpack.c.b16 %v481, %v480
      %498 = vmatprep.subr.bf16.mxu0 0
      %499 = vmatpush1.bf16.msra.mxu0 %v489
      %500 = vmatprep.subr.bf16.mxu0 0
      %501 = vmatpush1.bf16.msra.mxu0 %v488
      %502 = vmatprep.subr.bf16.mxu0 0
      %503 = vmatpush1.bf16.msra.mxu0 %v487
      %504 = vmatprep.subr.bf16.mxu0 0
      %505 = vmatpush1.bf16.msra.mxu0 %v486
      %506 = vmatprep.subr.bf16.mxu0 0
      %507 = vmatpush1.bf16.msra.mxu0 %v485
      %508 = vmatprep.subr.bf16.mxu0 0
      %509 = vmatpush1.bf16.msra.mxu0 %v484
      %510 = vmatprep.subr.bf16.mxu0 0
      %511 = vmatpush1.bf16.msra.mxu0 %v483
      %512 = vmatprep.subr.bf16.mxu0 0
      %513 = vmatpush1.bf16.msra.mxu0 %v482
      %514 = vmatprep.subr.bf16.mxu0 0
      %515 = vmatpush2.bf16.msra.mxu0 0
      %516 = vmatprep.subr.bf16.mxu0 0
      %517 = vmatpush2.bf16.msra.mxu0 0
      %518 = vmatprep.subr.bf16.mxu0 0
      %519 = vmatpush2.bf16.msra.mxu0 0
      %520 = vmatprep.subr.bf16.mxu0 0
      %521 = vmatpush2.bf16.msra.mxu0 0
      %522 = vmatprep.subr.bf16.mxu0 0
      %523 = vmatpush2.bf16.msra.mxu0 0
      %524 = vmatprep.subr.bf16.mxu0 0
      %525 = vmatpush2.bf16.msra.mxu0 0
      %526 = vmatprep.subr.bf16.mxu0 0
      %527 = vmatpush2.bf16.msra.mxu0 0
      %528 = vmatprep.subr.bf16.mxu0 0
      %529 = vmatpush2.bf16.msra.mxu0 0
      %530 = vmatprep.mubr.bf16.mxu0 0
      %531 = vmatmul.mubr.bf16.gmra.mxu0 %v419
      %v532 = vpop.f32.mrf.mxu0
      %v533 = vadd.f32 %v448, %v532
      %v534 = vpop.f32.mrf.mxu0
      %v535 = vpop.f32.mrf.mxu0
      %v536 = vadd.f32 %v448, %v535
      %v537 = vpop.f32.mrf.mxu0
      %538 = vmatprep.mubr.bf16.mxu0 0
      %539 = vmatmul.mubr.bf16.gmra.mxu0 %v420
      %v540 = vpop.f32.mrf.mxu0
      %v541 = vadd.f32 %v448, %v540
      %v542 = vpop.f32.mrf.mxu0
      %v543 = vpop.f32.mrf.mxu0
      %v544 = vadd.f32 %v448, %v543
      %v545 = vpop.f32.mrf.mxu0
      %546 = vmatprep.mubr.bf16.mxu0 0
      %547 = vmatmul.mubr.bf16.gmra.mxu0 %v421
      %v548 = vpop.f32.mrf.mxu0
      %v549 = vadd.f32 %v448, %v548
      %v550 = vpop.f32.mrf.mxu0
      %v551 = vpop.f32.mrf.mxu0
      %v552 = vadd.f32 %v448, %v551
      %v553 = vpop.f32.mrf.mxu0
      %554 = vmatprep.mubr.bf16.mxu0 0
      %555 = vmatmul.mubr.bf16.gmra.mxu0 %v422
      %v556 = vpop.f32.mrf.mxu0
      %v557 = vadd.f32 %v448, %v556
      %v558 = vpop.f32.mrf.mxu0
      %v559 = vpop.f32.mrf.mxu0
      %v560 = vadd.f32 %v448, %v559
      %v561 = vpop.f32.mrf.mxu0
      %562 = vmatprep.mubr.bf16.mxu0 0
      %563 = vmatmul.mubr.bf16.gmra.mxu0 %v423
      %v564 = vpop.f32.mrf.mxu0
      %v565 = vadd.f32 %v448, %v564
      %v566 = vpop.f32.mrf.mxu0
      %v567 = vpop.f32.mrf.mxu0
      %v568 = vadd.f32 %v448, %v567
      %v569 = vpop.f32.mrf.mxu0
      %570 = vmatprep.mubr.bf16.mxu0 0
      %571 = vmatmul.mubr.bf16.gmra.mxu0 %v424
      %v572 = vpop.f32.mrf.mxu0
      %v573 = vadd.f32 %v448, %v572
      %v574 = vpop.f32.mrf.mxu0
      %v575 = vpop.f32.mrf.mxu0
      %v576 = vadd.f32 %v448, %v575
      %v577 = vpop.f32.mrf.mxu0
      %578 = vmatprep.mubr.bf16.mxu0 0
      %579 = vmatmul.mubr.bf16.gmra.mxu0 %v425
      %v580 = vpop.f32.mrf.mxu0
      %v581 = vadd.f32 %v448, %v580
      %v582 = vpop.f32.mrf.mxu0
      %v583 = vpop.f32.mrf.mxu0
      %v584 = vadd.f32 %v448, %v583
      %v585 = vpop.f32.mrf.mxu0
      %586 = vmatprep.mubr.bf16.mxu0 0
      %587 = vmatmul.mubr.bf16.gmra.mxu0 %v426
      %v588 = vpop.f32.mrf.mxu0
      %v589 = vadd.f32 %v448, %v588
      %v590 = vpop.f32.mrf.mxu0
      %v591 = vpop.f32.mrf.mxu0
      %v592 = vadd.f32 %v448, %v591
      %v593 = vpop.f32.mrf.mxu0
      %594 = vdwg.mxu0
      %v595 = vmax.f32 %v533, 0.0
      %v596 = vmax.f32 %v536, 0.0
      %v597 = vmax.f32 %v541, 0.0
      %v598 = vmax.f32 %v544, 0.0
      %v599 = vmax.f32 %v549, 0.0
      %v600 = vmax.f32 %v552, 0.0
      %v601 = vmax.f32 %v557, 0.0
      %v602 = vmax.f32 %v560, 0.0
      %v603 = vmax.f32 %v565, 0.0
      %v604 = vmax.f32 %v568, 0.0
      %v605 = vmax.f32 %v573, 0.0
      %v606 = vmax.f32 %v576, 0.0
      %v607 = vmax.f32 %v581, 0.0
      %v608 = vmax.f32 %v584, 0.0
      %v609 = vmax.f32 %v589, 0.0
      %v610 = vmax.f32 %v592, 0.0
      %v611 = vpack.c.bf16 %v596, %v595
      %v612 = vpack.c.bf16 %v598, %v597
      %v613 = vpack.c.bf16 %v600, %v599
      %v614 = vpack.c.bf16 %v602, %v601
      %v615 = vpack.c.bf16 %v604, %v603
      %v616 = vpack.c.bf16 %v606, %v605
      %v617 = vpack.c.bf16 %v608, %v607
      %v618 = vpack.c.bf16 %v610, %v609
      %v619 = vld [vmem:[%s4] sm:$0xf]
      %v620 = vld [vmem:[%s4 + $0x4] sm:$0xf]
      %v621 = vld [vmem:[%s4 + $0x8] sm:$0xf]
      %v622 = vld [vmem:[%s4 + $0xc] sm:$0xf]
      %v623 = vld [vmem:[%s4 + $0x10] sm:$0xf]
      %v624 = vld [vmem:[%s4 + $0x14] sm:$0xf]
      %v625 = vld [vmem:[%s4 + $0x18] sm:$0xf]
      %v626 = vld [vmem:[%s4 + $0x1c] sm:$0xf]
      %v627 = vld [vmem:[%s4 + $0x20] sm:$0xf]
      %v628 = vld [vmem:[%s4 + $0x24] sm:$0xf]
      %v629 = vld [vmem:[%s4 + $0x28] sm:$0xf]
      %v630 = vld [vmem:[%s4 + $0x2c] sm:$0xf]
      %v631 = vld [vmem:[%s4 + $0x30] sm:$0xf]
      %v632 = vld [vmem:[%s4 + $0x34] sm:$0xf]
      %v633 = vld [vmem:[%s4 + $0x38] sm:$0xf]
      %v634 = vld [vmem:[%s4 + $0x3c] sm:$0xf]
      %v635 = vld [vmem:[%s5] sm:$0x1]
      %v637 = vlaneseq
      %v638 = vshrl.u32 %v637, 7
      %v639 = vsub.s32 0, %v638
      %v640 = vrot.slane %v635, %v639
      %v658 = vunpack.c.l.b16 %v619
      %v659 = vunpack.c.l.b16 %v620
      %v660 = vunpack.c.l.b16 %v621
      %v661 = vunpack.c.l.b16 %v622
      %v662 = vunpack.c.l.b16 %v623
      %v663 = vunpack.c.l.b16 %v624
      %v664 = vunpack.c.l.b16 %v625
      %v665 = vunpack.c.l.b16 %v626
      %v666 = vunpack.c.l.b16 %v627
      %v667 = vunpack.c.l.b16 %v628
      %v668 = vunpack.c.l.b16 %v629
      %v669 = vunpack.c.l.b16 %v630
      %v670 = vunpack.c.l.b16 %v631
      %v671 = vunpack.c.l.b16 %v632
      %v672 = vunpack.c.l.b16 %v633
      %v673 = vunpack.c.l.b16 %v634
      %v674 = vpack.c.b16 %v659, %v658
      %v675 = vpack.c.b16 %v661, %v660
      %v676 = vpack.c.b16 %v663, %v662
      %v677 = vpack.c.b16 %v665, %v664
      %v678 = vpack.c.b16 %v667, %v666
      %v679 = vpack.c.b16 %v669, %v668
      %v680 = vpack.c.b16 %v671, %v670
      %v681 = vpack.c.b16 %v673, %v672
      %690 = vmatprep.subr.bf16.mxu0 0
      %691 = vmatpush1.bf16.msra.mxu0 %v681
      %692 = vmatprep.subr.bf16.mxu0 0
      %693 = vmatpush1.bf16.msra.mxu0 %v680
      %694 = vmatprep.subr.bf16.mxu0 0
      %695 = vmatpush1.bf16.msra.mxu0 %v679
      %696 = vmatprep.subr.bf16.mxu0 0
      %697 = vmatpush1.bf16.msra.mxu0 %v678
      %698 = vmatprep.subr.bf16.mxu0 0
      %699 = vmatpush1.bf16.msra.mxu0 %v677
      %700 = vmatprep.subr.bf16.mxu0 0
      %701 = vmatpush1.bf16.msra.mxu0 %v676
      %702 = vmatprep.subr.bf16.mxu0 0
      %703 = vmatpush1.bf16.msra.mxu0 %v675
      %704 = vmatprep.subr.bf16.mxu0 0
      %705 = vmatpush1.bf16.msra.mxu0 %v674
      %706 = vmatprep.subr.bf16.mxu0 0
      %707 = vmatpush2.bf16.msra.mxu0 0
      %708 = vmatprep.subr.bf16.mxu0 0
      %709 = vmatpush2.bf16.msra.mxu0 0
      %710 = vmatprep.subr.bf16.mxu0 0
      %711 = vmatpush2.bf16.msra.mxu0 0
      %712 = vmatprep.subr.bf16.mxu0 0
      %713 = vmatpush2.bf16.msra.mxu0 0
      %714 = vmatprep.subr.bf16.mxu0 0
      %715 = vmatpush2.bf16.msra.mxu0 0
      %716 = vmatprep.subr.bf16.mxu0 0
      %717 = vmatpush2.bf16.msra.mxu0 0
      %718 = vmatprep.subr.bf16.mxu0 0
      %719 = vmatpush2.bf16.msra.mxu0 0
      %720 = vmatprep.subr.bf16.mxu0 0
      %721 = vmatpush2.bf16.msra.mxu0 0
      %722 = vmatprep.mubr.bf16.mxu0 0
      %723 = vmatmul.mubr.bf16.gmra.mxu0 %v611
      %v724 = vpop.f32.mrf.mxu0
      %v725 = vadd.f32 %v640, %v724
      %v726 = vpop.f32.mrf.mxu0
      %v727 = vpop.f32.mrf.mxu0
      %v728 = vadd.f32 %v640, %v727
      %v729 = vpop.f32.mrf.mxu0
      %730 = vmatprep.mubr.bf16.mxu0 0
      %731 = vmatmul.mubr.bf16.gmra.mxu0 %v612
      %v732 = vpop.f32.mrf.mxu0
      %v733 = vadd.f32 %v640, %v732
      %v734 = vpop.f32.mrf.mxu0
      %v735 = vpop.f32.mrf.mxu0
      %v736 = vadd.f32 %v640, %v735
      %v737 = vpop.f32.mrf.mxu0
      %738 = vmatprep.mubr.bf16.mxu0 0
      %739 = vmatmul.mubr.bf16.gmra.mxu0 %v613
      %v740 = vpop.f32.mrf.mxu0
      %v741 = vadd.f32 %v640, %v740
      %v742 = vpop.f32.mrf.mxu0
      %v743 = vpop.f32.mrf.mxu0
      %v744 = vadd.f32 %v640, %v743
      %v745 = vpop.f32.mrf.mxu0
      %746 = vmatprep.mubr.bf16.mxu0 0
      %747 = vmatmul.mubr.bf16.gmra.mxu0 %v614
      %v748 = vpop.f32.mrf.mxu0
      %v749 = vadd.f32 %v640, %v748
      %v750 = vpop.f32.mrf.mxu0
      %v751 = vpop.f32.mrf.mxu0
      %v752 = vadd.f32 %v640, %v751
      %v753 = vpop.f32.mrf.mxu0
      %754 = vmatprep.mubr.bf16.mxu0 0
      %755 = vmatmul.mubr.bf16.gmra.mxu0 %v615
      %v756 = vpop.f32.mrf.mxu0
      %v757 = vadd.f32 %v640, %v756
      %v758 = vpop.f32.mrf.mxu0
      %v759 = vpop.f32.mrf.mxu0
      %v760 = vadd.f32 %v640, %v759
      %v761 = vpop.f32.mrf.mxu0
      %762 = vmatprep.mubr.bf16.mxu0 0
      %763 = vmatmul.mubr.bf16.gmra.mxu0 %v616
      %v764 = vpop.f32.mrf.mxu0
      %v765 = vadd.f32 %v640, %v764
      %v766 = vpop.f32.mrf.mxu0
      %v767 = vpop.f32.mrf.mxu0
      %v768 = vadd.f32 %v640, %v767
      %v769 = vpop.f32.mrf.mxu0
      %770 = vmatprep.mubr.bf16.mxu0 0
      %771 = vmatmul.mubr.bf16.gmra.mxu0 %v617
      %v772 = vpop.f32.mrf.mxu0
      %v773 = vadd.f32 %v640, %v772
      %v774 = vpop.f32.mrf.mxu0
      %v775 = vpop.f32.mrf.mxu0
      %v776 = vadd.f32 %v640, %v775
      %v777 = vpop.f32.mrf.mxu0
      %778 = vmatprep.mubr.bf16.mxu0 0
      %779 = vmatmul.mubr.bf16.gmra.mxu0 %v618
      %v780 = vpop.f32.mrf.mxu0
      %v781 = vadd.f32 %v640, %v780
      %v782 = vpop.f32.mrf.mxu0
      %v783 = vpop.f32.mrf.mxu0
      %v784 = vadd.f32 %v640, %v783
      %v785 = vpop.f32.mrf.mxu0
      %786 = vdwg.mxu0
      %v787 = vmax.f32 %v725, 0.0
      %v788 = vmax.f32 %v728, 0.0
      %v789 = vmax.f32 %v733, 0.0
      %v790 = vmax.f32 %v736, 0.0
      %v791 = vmax.f32 %v741, 0.0
      %v792 = vmax.f32 %v744, 0.0
      %v793 = vmax.f32 %v749, 0.0
      %v794 = vmax.f32 %v752, 0.0
      %v795 = vmax.f32 %v757, 0.0
      %v796 = vmax.f32 %v760, 0.0
      %v797 = vmax.f32 %v765, 0.0
      %v798 = vmax.f32 %v768, 0.0
      %v799 = vmax.f32 %v773, 0.0
      %v800 = vmax.f32 %v776, 0.0
      %v801 = vmax.f32 %v781, 0.0
      %v802 = vmax.f32 %v784, 0.0
      %v803 = vpack.c.bf16 %v788, %v787
      %v804 = vpack.c.bf16 %v790, %v789
      %v805 = vpack.c.bf16 %v792, %v791
      %v806 = vpack.c.bf16 %v794, %v793
      %v807 = vpack.c.bf16 %v796, %v795
      %v808 = vpack.c.bf16 %v798, %v797
      %v809 = vpack.c.bf16 %v800, %v799
      %v810 = vpack.c.bf16 %v802, %v801
      %v811 = vld [vmem:[%s6] sm:$0xff]
      %v812 = vld [vmem:[%s6 + $0x8] sm:$0xf]
      %v813 = vld [vmem:[%s6 + $0xc] sm:$0xff]
      %v814 = vld [vmem:[%s6 + $0x14] sm:$0xf]
      %v815 = vld [vmem:[%s6 + $0x18] sm:$0xff]
      %v816 = vld [vmem:[%s6 + $0x20] sm:$0xf]
      %v817 = vld [vmem:[%s6 + $0x24] sm:$0xff]
      %v818 = vld [vmem:[%s6 + $0x2c] sm:$0xf]
      %v819 = vld [vmem:[%s6 + $0x30] sm:$0xff]
      %v820 = vld [vmem:[%s6 + $0x38] sm:$0xf]
      %v821 = vld [vmem:[%s6 + $0x3c] sm:$0xff]
      %v822 = vld [vmem:[%s6 + $0x44] sm:$0xf]
      %v823 = vld [vmem:[%s6 + $0x48] sm:$0xff]
      %v824 = vld [vmem:[%s6 + $0x50] sm:$0xf]
      %v825 = vld [vmem:[%s6 + $0x54] sm:$0xff]
      %v826 = vld [vmem:[%s6 + $0x5c] sm:$0xf]
      %v827 = vld [vmem:[%s6 + $0x60] sm:$0xff]
      %v828 = vld [vmem:[%s6 + $0x68] sm:$0xf]
      %v829 = vld [vmem:[%s6 + $0x6c] sm:$0xff]
      %v830 = vld [vmem:[%s6 + $0x74] sm:$0xf]
      %v831 = vld [vmem:[%s6 + $0x78] sm:$0xff]
      %v832 = vld [vmem:[%s6 + $0x80] sm:$0xf]
      %v833 = vld [vmem:[%s6 + $0x84] sm:$0xff]
      %v834 = vld [vmem:[%s6 + $0x8c] sm:$0xf]
      %v835 = vld [vmem:[%s6 + $0x90] sm:$0xff]
      %v836 = vld [vmem:[%s6 + $0x98] sm:$0xf]
      %v837 = vld [vmem:[%s6 + $0x9c] sm:$0xff]
      %v838 = vld [vmem:[%s6 + $0xa4] sm:$0xf]
      %v839 = vld [vmem:[%s6 + $0xa8] sm:$0xff]
      %v840 = vld [vmem:[%s6 + $0xb0] sm:$0xf]
      %v841 = vld [vmem:[%s6 + $0xb4] sm:$0xff]
      %v842 = vld [vmem:[%s6 + $0xbc] sm:$0xf]
      %v843 = vld [vmem:[%s7] sm:$0x7]
      %v845 = vlaneseq
      %v846 = vshrl.u32 %v845, 7
      %v847 = vsub.s32 0, %v846
      %v848 = vrot.slane %v843, %v847
      %v849 = vlaneseq
      %v850 = vshrl.u32 %v849, 7
      %v851 = vsub.s32 1, %v850
      %v852 = vrot.slane %v843, %v851
      %v853 = vlaneseq
      %v854 = vshrl.u32 %v853, 7
      %v855 = vsub.s32 2, %v854
      %v856 = vrot.slane %v843, %v855
      %v892 = vunpack.c.l.b16 %v811
      %v893 = vunpack.c.h.b16 %v811
      %v894 = vunpack.c.l.b16 %v812
      %v895 = vunpack.c.l.b16 %v813
      %v896 = vunpack.c.h.b16 %v813
      %v897 = vunpack.c.l.b16 %v814
      %v898 = vunpack.c.l.b16 %v815
      %v899 = vunpack.c.h.b16 %v815
      %v900 = vunpack.c.l.b16 %v816
      %v901 = vunpack.c.l.b16 %v817
      %v902 = vunpack.c.h.b16 %v817
      %v903 = vunpack.c.l.b16 %v818
      %v904 = vunpack.c.l.b16 %v819
      %v905 = vunpack.c.h.b16 %v819
      %v906 = vunpack.c.l.b16 %v820
      %v907 = vunpack.c.l.b16 %v821
      %v908 = vunpack.c.h.b16 %v821
      %v909 = vunpack.c.l.b16 %v822
      %v910 = vunpack.c.l.b16 %v823
      %v911 = vunpack.c.h.b16 %v823
      %v912 = vunpack.c.l.b16 %v824
      %v913 = vunpack.c.l.b16 %v825
      %v914 = vunpack.c.h.b16 %v825
      %v915 = vunpack.c.l.b16 %v826
      %v916 = vunpack.c.l.b16 %v827
      %v917 = vunpack.c.h.b16 %v827
      %v918 = vunpack.c.l.b16 %v828
      %v919 = vunpack.c.l.b16 %v829
      %v920 = vunpack.c.h.b16 %v829
      %v921 = vunpack.c.l.b16 %v830
      %v922 = vunpack.c.l.b16 %v831
      %v923 = vunpack.c.h.b16 %v831
      %v924 = vunpack.c.l.b16 %v832
      %v925 = vunpack.c.l.b16 %v833
      %v926 = vunpack.c.h.b16 %v833
      %v927 = vunpack.c.l.b16 %v834
      %v928 = vunpack.c.l.b16 %v835
      %v929 = vunpack.c.h.b16 %v835
      %v930 = vunpack.c.l.b16 %v836
      %v931 = vunpack.c.l.b16 %v837
      %v932 = vunpack.c.h.b16 %v837
      %v933 = vunpack.c.l.b16 %v838
      %v934 = vunpack.c.l.b16 %v839
      %v935 = vunpack.c.h.b16 %v839
      %v936 = vunpack.c.l.b16 %v840
      %v937 = vunpack.c.l.b16 %v841
      %v938 = vunpack.c.h.b16 %v841
      %v939 = vunpack.c.l.b16 %v842
      %v940 = vpack.c.b16 %v895, %v892
      %v941 = vpack.c.b16 %v896, %v893
      %v942 = vpack.c.b16 %v897, %v894
      %v943 = vpack.c.b16 %v901, %v898
      %v944 = vpack.c.b16 %v902, %v899
      %v945 = vpack.c.b16 %v903, %v900
      %v946 = vpack.c.b16 %v907, %v904
      %v947 = vpack.c.b16 %v908, %v905
      %v948 = vpack.c.b16 %v909, %v906
      %v949 = vpack.c.b16 %v913, %v910
      %v950 = vpack.c.b16 %v914, %v911
      %v951 = vpack.c.b16 %v915, %v912
      %v952 = vpack.c.b16 %v919, %v916
      %v953 = vpack.c.b16 %v920, %v917
      %v954 = vpack.c.b16 %v921, %v918
      %v955 = vpack.c.b16 %v925, %v922
      %v956 = vpack.c.b16 %v926, %v923
      %v957 = vpack.c.b16 %v927, %v924
      %v958 = vpack.c.b16 %v931, %v928
      %v959 = vpack.c.b16 %v932, %v929
      %v960 = vpack.c.b16 %v933, %v930
      %v961 = vpack.c.b16 %v937, %v934
      %v962 = vpack.c.b16 %v938, %v935
      %v963 = vpack.c.b16 %v939, %v936
      %988 = vmatprep.subr.bf16.mxu0 %v962
      %989 = vmatpush1.bf16.msra.mxu0 %v961
      %990 = vmatprep.subr.bf16.mxu0 %v959
      %991 = vmatpush1.bf16.msra.mxu0 %v958
      %992 = vmatprep.subr.bf16.mxu0 %v956
      %993 = vmatpush1.bf16.msra.mxu0 %v955
      %994 = vmatprep.subr.bf16.mxu0 %v953
      %995 = vmatpush1.bf16.msra.mxu0 %v952
      %996 = vmatprep.subr.bf16.mxu0 %v950
      %997 = vmatpush1.bf16.msra.mxu0 %v949
      %998 = vmatprep.subr.bf16.mxu0 %v947
      %999 = vmatpush1.bf16.msra.mxu0 %v946
      %1000 = vmatprep.subr.bf16.mxu0 %v944
      %1001 = vmatpush1.bf16.msra.mxu0 %v943
      %1002 = vmatprep.subr.bf16.mxu0 %v941
      %1003 = vmatpush1.bf16.msra.mxu0 %v940
      %1004 = vmatprep.subr.bf16.mxu0 0
      %1005 = vmatpush2.bf16.msra.mxu0 0
      %1006 = vmatprep.subr.bf16.mxu0 0
      %1007 = vmatpush2.bf16.msra.mxu0 0
      %1008 = vmatprep.subr.bf16.mxu0 0
      %1009 = vmatpush2.bf16.msra.mxu0 0
      %1010 = vmatprep.subr.bf16.mxu0 0
      %1011 = vmatpush2.bf16.msra.mxu0 0
      %1012 = vmatprep.subr.bf16.mxu0 0
      %1013 = vmatpush2.bf16.msra.mxu0 0
      %1014 = vmatprep.subr.bf16.mxu0 0
      %1015 = vmatpush2.bf16.msra.mxu0 0
      %1016 = vmatprep.subr.bf16.mxu0 0
      %1017 = vmatpush2.bf16.msra.mxu0 0
      %1018 = vmatprep.subr.bf16.mxu0 0
      %1019 = vmatpush2.bf16.msra.mxu0 0
      %1020 = vmatprep.mubr.bf16.mxu0 0
      %1021 = vmatmul.mubr.bf16.gmra.mxu0 %v803
      %v1022 = vpop.f32.mrf.mxu0
      %v1023 = vadd.f32 %v848, %v1022
      %v1024 = vpop.f32.mrf.mxu0
      %v1025 = vadd.f32 %v852, %v1024
      %v1026 = vpop.f32.mrf.mxu0
      %v1027 = vadd.f32 %v848, %v1026
      %v1028 = vpop.f32.mrf.mxu0
      %v1029 = vadd.f32 %v852, %v1028
      %1030 = vmatprep.mubr.bf16.mxu0 0
      %1031 = vmatmul.mubr.bf16.gmra.mxu0 %v804
      %v1032 = vpop.f32.mrf.mxu0
      %v1033 = vadd.f32 %v848, %v1032
      %v1034 = vpop.f32.mrf.mxu0
      %v1035 = vadd.f32 %v852, %v1034
      %v1036 = vpop.f32.mrf.mxu0
      %v1037 = vadd.f32 %v848, %v1036
      %v1038 = vpop.f32.mrf.mxu0
      %v1039 = vadd.f32 %v852, %v1038
      %1040 = vmatprep.mubr.bf16.mxu0 0
      %1041 = vmatmul.mubr.bf16.gmra.mxu0 %v805
      %v1042 = vpop.f32.mrf.mxu0
      %v1043 = vadd.f32 %v848, %v1042
      %v1044 = vpop.f32.mrf.mxu0
      %v1045 = vadd.f32 %v852, %v1044
      %v1046 = vpop.f32.mrf.mxu0
      %v1047 = vadd.f32 %v848, %v1046
      %v1048 = vpop.f32.mrf.mxu0
      %v1049 = vadd.f32 %v852, %v1048
      %1050 = vmatprep.mubr.bf16.mxu0 0
      %1051 = vmatmul.mubr.bf16.gmra.mxu0 %v806
      %v1052 = vpop.f32.mrf.mxu0
      %v1053 = vadd.f32 %v848, %v1052
      %v1054 = vpop.f32.mrf.mxu0
      %v1055 = vadd.f32 %v852, %v1054
      %v1056 = vpop.f32.mrf.mxu0
      %v1057 = vadd.f32 %v848, %v1056
      %v1058 = vpop.f32.mrf.mxu0
      %v1059 = vadd.f32 %v852, %v1058
      %1060 = vmatprep.mubr.bf16.mxu0 0
      %1061 = vmatmul.mubr.bf16.gmra.mxu0 %v807
      %v1062 = vpop.f32.mrf.mxu0
      %v1063 = vadd.f32 %v848, %v1062
      %v1064 = vpop.f32.mrf.mxu0
      %v1065 = vadd.f32 %v852, %v1064
      %v1066 = vpop.f32.mrf.mxu0
      %v1067 = vadd.f32 %v848, %v1066
      %v1068 = vpop.f32.mrf.mxu0
      %v1069 = vadd.f32 %v852, %v1068
      %1070 = vmatprep.mubr.bf16.mxu0 0
      %1071 = vmatmul.mubr.bf16.gmra.mxu0 %v808
      %v1072 = vpop.f32.mrf.mxu0
      %v1073 = vadd.f32 %v848, %v1072
      %v1074 = vpop.f32.mrf.mxu0
      %v1075 = vadd.f32 %v852, %v1074
      %v1076 = vpop.f32.mrf.mxu0
      %v1077 = vadd.f32 %v848, %v1076
      %v1078 = vpop.f32.mrf.mxu0
      %v1079 = vadd.f32 %v852, %v1078
      %1080 = vmatprep.mubr.bf16.mxu0 0
      %1081 = vmatmul.mubr.bf16.gmra.mxu0 %v809
      %v1082 = vpop.f32.mrf.mxu0
      %v1083 = vadd.f32 %v848, %v1082
      %v1084 = vpop.f32.mrf.mxu0
      %v1085 = vadd.f32 %v852, %v1084
      %v1086 = vpop.f32.mrf.mxu0
      %v1087 = vadd.f32 %v848, %v1086
      %v1088 = vpop.f32.mrf.mxu0
      %v1089 = vadd.f32 %v852, %v1088
      %1090 = vmatprep.mubr.bf16.mxu0 0
      %1091 = vmatmul.mubr.bf16.gmra.mxu0 %v810
      %v1092 = vpop.f32.mrf.mxu0
      %v1093 = vadd.f32 %v848, %v1092
      %v1094 = vpop.f32.mrf.mxu0
      %v1095 = vadd.f32 %v852, %v1094
      %v1096 = vpop.f32.mrf.mxu0
      %v1097 = vadd.f32 %v848, %v1096
      %v1098 = vpop.f32.mrf.mxu0
      %v1099 = vadd.f32 %v852, %v1098
      %1100 = vdwg.mxu0
      %1101 = vmatprep.subr.bf16.mxu0 0
      %1102 = vmatpush1.bf16.msra.mxu0 %v963
      %1103 = vmatprep.subr.bf16.mxu0 0
      %1104 = vmatpush1.bf16.msra.mxu0 %v960
      %1105 = vmatprep.subr.bf16.mxu0 0
      %1106 = vmatpush1.bf16.msra.mxu0 %v957
      %1107 = vmatprep.subr.bf16.mxu0 0
      %1108 = vmatpush1.bf16.msra.mxu0 %v954
      %1109 = vmatprep.subr.bf16.mxu0 0
      %1110 = vmatpush1.bf16.msra.mxu0 %v951
      %1111 = vmatprep.subr.bf16.mxu0 0
      %1112 = vmatpush1.bf16.msra.mxu0 %v948
      %1113 = vmatprep.subr.bf16.mxu0 0
      %1114 = vmatpush1.bf16.msra.mxu0 %v945
      %1115 = vmatprep.subr.bf16.mxu0 0
      %1116 = vmatpush1.bf16.msra.mxu0 %v942
      %1117 = vmatprep.subr.bf16.mxu0 0
      %1118 = vmatpush2.bf16.msra.mxu0 0
      %1119 = vmatprep.subr.bf16.mxu0 0
      %1120 = vmatpush2.bf16.msra.mxu0 0
      %1121 = vmatprep.subr.bf16.mxu0 0
      %1122 = vmatpush2.bf16.msra.mxu0 0
      %1123 = vmatprep.subr.bf16.mxu0 0
      %1124 = vmatpush2.bf16.msra.mxu0 0
      %1125 = vmatprep.subr.bf16.mxu0 0
      %1126 = vmatpush2.bf16.msra.mxu0 0
      %1127 = vmatprep.subr.bf16.mxu0 0
      %1128 = vmatpush2.bf16.msra.mxu0 0
      %1129 = vmatprep.subr.bf16.mxu0 0
      %1130 = vmatpush2.bf16.msra.mxu0 0
      %1131 = vmatprep.subr.bf16.mxu0 0
      %1132 = vmatpush2.bf16.msra.mxu0 0
      %1133 = vmatprep.mubr.bf16.mxu0 0
      %1134 = vmatmul.mubr.bf16.gmra.mxu0 %v803
      %v1135 = vpop.f32.mrf.mxu0
      %v1136 = vadd.f32 %v856, %v1135
      %v1137 = vpop.f32.mrf.mxu0
      %v1138 = vpop.f32.mrf.mxu0
      %v1139 = vadd.f32 %v856, %v1138
      %v1140 = vpop.f32.mrf.mxu0
      %1141 = vmatprep.mubr.bf16.mxu0 0
      %1142 = vmatmul.mubr.bf16.gmra.mxu0 %v804
      %v1143 = vpop.f32.mrf.mxu0
      %v1144 = vadd.f32 %v856, %v1143
      %v1145 = vpop.f32.mrf.mxu0
      %v1146 = vpop.f32.mrf.mxu0
      %v1147 = vadd.f32 %v856, %v1146
      %v1148 = vpop.f32.mrf.mxu0
      %1149 = vmatprep.mubr.bf16.mxu0 0
      %1150 = vmatmul.mubr.bf16.gmra.mxu0 %v805
      %v1151 = vpop.f32.mrf.mxu0
      %v1152 = vadd.f32 %v856, %v1151
      %v1153 = vpop.f32.mrf.mxu0
      %v1154 = vpop.f32.mrf.mxu0
      %v1155 = vadd.f32 %v856, %v1154
      %v1156 = vpop.f32.mrf.mxu0
      %1157 = vmatprep.mubr.bf16.mxu0 0
      %1158 = vmatmul.mubr.bf16.gmra.mxu0 %v806
      %v1159 = vpop.f32.mrf.mxu0
      %v1160 = vadd.f32 %v856, %v1159
      %v1161 = vpop.f32.mrf.mxu0
      %v1162 = vpop.f32.mrf.mxu0
      %v1163 = vadd.f32 %v856, %v1162
      %v1164 = vpop.f32.mrf.mxu0
      %1165 = vmatprep.mubr.bf16.mxu0 0
      %1166 = vmatmul.mubr.bf16.gmra.mxu0 %v807
      %v1167 = vpop.f32.mrf.mxu0
      %v1168 = vadd.f32 %v856, %v1167
      %v1169 = vpop.f32.mrf.mxu0
      %v1170 = vpop.f32.mrf.mxu0
      %v1171 = vadd.f32 %v856, %v1170
      %v1172 = vpop.f32.mrf.mxu0
      %1173 = vmatprep.mubr.bf16.mxu0 0
      %1174 = vmatmul.mubr.bf16.gmra.mxu0 %v808
      %v1175 = vpop.f32.mrf.mxu0
      %v1176 = vadd.f32 %v856, %v1175
      %v1177 = vpop.f32.mrf.mxu0
      %v1178 = vpop.f32.mrf.mxu0
      %v1179 = vadd.f32 %v856, %v1178
      %v1180 = vpop.f32.mrf.mxu0
      %1181 = vmatprep.mubr.bf16.mxu0 0
      %1182 = vmatmul.mubr.bf16.gmra.mxu0 %v809
      %v1183 = vpop.f32.mrf.mxu0
      %v1184 = vadd.f32 %v856, %v1183
      %v1185 = vpop.f32.mrf.mxu0
      %v1186 = vpop.f32.mrf.mxu0
      %v1187 = vadd.f32 %v856, %v1186
      %v1188 = vpop.f32.mrf.mxu0
      %1189 = vmatprep.mubr.bf16.mxu0 0
      %1190 = vmatmul.mubr.bf16.gmra.mxu0 %v810
      %v1191 = vpop.f32.mrf.mxu0
      %v1192 = vadd.f32 %v856, %v1191
      %v1193 = vpop.f32.mrf.mxu0
      %v1194 = vpop.f32.mrf.mxu0
      %v1195 = vadd.f32 %v856, %v1194
      %v1196 = vpop.f32.mrf.mxu0
      %1197 = vdwg.mxu0
      %v1198 = vxor.u32 %v1023, 2147483648
      %v1199 = vxor.u32 %v1027, 2147483648
      %v1200 = vxor.u32 %v1033, 2147483648
      %v1201 = vxor.u32 %v1037, 2147483648
      %v1202 = vxor.u32 %v1043, 2147483648
      %v1203 = vxor.u32 %v1047, 2147483648
      %v1204 = vxor.u32 %v1053, 2147483648
      %v1205 = vxor.u32 %v1057, 2147483648
      %v1206 = vxor.u32 %v1063, 2147483648
      %v1207 = vxor.u32 %v1067, 2147483648
      %v1208 = vxor.u32 %v1073, 2147483648
      %v1209 = vxor.u32 %v1077, 2147483648
      %v1210 = vxor.u32 %v1083, 2147483648
      %v1211 = vxor.u32 %v1087, 2147483648
      %v1212 = vxor.u32 %v1093, 2147483648
      %v1213 = vxor.u32 %v1097, 2147483648
      %v1214 = vmul.f32 %v1198, 1.442695
      %v1215 = vpow.pop %v1214
      %v1216 = vmul.f32 %v1199, 1.442695
      %v1217 = vpow.pop %v1216
      %v1218 = vmul.f32 %v1200, 1.442695
      %v1219 = vpow.pop %v1218
      %v1220 = vmul.f32 %v1201, 1.442695
      %v1221 = vpow.pop %v1220
      %v1222 = vmul.f32 %v1202, 1.442695
      %v1223 = vpow.pop %v1222
      %v1224 = vmul.f32 %v1203, 1.442695
      %v1225 = vpow.pop %v1224
      %v1226 = vmul.f32 %v1204, 1.442695
      %v1227 = vpow.pop %v1226
      %v1228 = vmul.f32 %v1205, 1.442695
      %v1229 = vpow.pop %v1228
      %v1230 = vmul.f32 %v1206, 1.442695
      %v1231 = vpow.pop %v1230
      %v1232 = vmul.f32 %v1207, 1.442695
      %v1233 = vpow.pop %v1232
      %v1234 = vmul.f32 %v1208, 1.442695
      %v1235 = vpow.pop %v1234
      %v1236 = vmul.f32 %v1209, 1.442695
      %v1237 = vpow.pop %v1236
      %v1238 = vmul.f32 %v1210, 1.442695
      %v1239 = vpow.pop %v1238
      %v1240 = vmul.f32 %v1211, 1.442695
      %v1241 = vpow.pop %v1240
      %v1242 = vmul.f32 %v1212, 1.442695
      %v1243 = vpow.pop %v1242
      %v1244 = vmul.f32 %v1213, 1.442695
      %v1245 = vpow.pop %v1244
      %v1246 = vadd.f32 %v1215, 1.0
      %v1247 = vadd.f32 %v1217, 1.0
      %v1248 = vadd.f32 %v1219, 1.0
      %v1249 = vadd.f32 %v1221, 1.0
      %v1250 = vadd.f32 %v1223, 1.0
      %v1251 = vadd.f32 %v1225, 1.0
      %v1252 = vadd.f32 %v1227, 1.0
      %v1253 = vadd.f32 %v1229, 1.0
      %v1254 = vadd.f32 %v1231, 1.0
      %v1255 = vadd.f32 %v1233, 1.0
      %v1256 = vadd.f32 %v1235, 1.0
      %v1257 = vadd.f32 %v1237, 1.0
      %v1258 = vadd.f32 %v1239, 1.0
      %v1259 = vadd.f32 %v1241, 1.0
      %v1260 = vadd.f32 %v1243, 1.0
      %v1261 = vadd.f32 %v1245, 1.0
      %v1262 = vrcp.pop %v1246
      %v1263 = vmul.f32 1.0, %v1262
      %v1264 = vrcp.pop %v1247
      %v1265 = vmul.f32 1.0, %v1264
      %v1266 = vrcp.pop %v1248
      %v1267 = vmul.f32 1.0, %v1266
      %v1268 = vrcp.pop %v1249
      %v1269 = vmul.f32 1.0, %v1268
      %v1270 = vrcp.pop %v1250
      %v1271 = vmul.f32 1.0, %v1270
      %v1272 = vrcp.pop %v1251
      %v1273 = vmul.f32 1.0, %v1272
      %v1274 = vrcp.pop %v1252
      %v1275 = vmul.f32 1.0, %v1274
      %v1276 = vrcp.pop %v1253
      %v1277 = vmul.f32 1.0, %v1276
      %v1278 = vrcp.pop %v1254
      %v1279 = vmul.f32 1.0, %v1278
      %v1280 = vrcp.pop %v1255
      %v1281 = vmul.f32 1.0, %v1280
      %v1282 = vrcp.pop %v1256
      %v1283 = vmul.f32 1.0, %v1282
      %v1284 = vrcp.pop %v1257
      %v1285 = vmul.f32 1.0, %v1284
      %v1286 = vrcp.pop %v1258
      %v1287 = vmul.f32 1.0, %v1286
      %v1288 = vrcp.pop %v1259
      %v1289 = vmul.f32 1.0, %v1288
      %v1290 = vrcp.pop %v1260
      %v1291 = vmul.f32 1.0, %v1290
      %v1292 = vrcp.pop %v1261
      %v1293 = vmul.f32 1.0, %v1292
      %v1294 = vtanh.pop %v1025
      %v1295 = vtanh.pop %v1029
      %v1296 = vtanh.pop %v1035
      %v1297 = vtanh.pop %v1039
      %v1298 = vtanh.pop %v1045
      %v1299 = vtanh.pop %v1049
      %v1300 = vtanh.pop %v1055
      %v1301 = vtanh.pop %v1059
      %v1302 = vtanh.pop %v1065
      %v1303 = vtanh.pop %v1069
      %v1304 = vtanh.pop %v1075
      %v1305 = vtanh.pop %v1079
      %v1306 = vtanh.pop %v1085
      %v1307 = vtanh.pop %v1089
      %v1308 = vtanh.pop %v1095
      %v1309 = vtanh.pop %v1099
      %v1310 = vxor.u32 %v1136, 2147483648
      %v1311 = vxor.u32 %v1139, 2147483648
      %v1312 = vxor.u32 %v1144, 2147483648
      %v1313 = vxor.u32 %v1147, 2147483648
      %v1314 = vxor.u32 %v1152, 2147483648
      %v1315 = vxor.u32 %v1155, 2147483648
      %v1316 = vxor.u32 %v1160, 2147483648
      %v1317 = vxor.u32 %v1163, 2147483648
      %v1318 = vxor.u32 %v1168, 2147483648
      %v1319 = vxor.u32 %v1171, 2147483648
      %v1320 = vxor.u32 %v1176, 2147483648
      %v1321 = vxor.u32 %v1179, 2147483648
      %v1322 = vxor.u32 %v1184, 2147483648
      %v1323 = vxor.u32 %v1187, 2147483648
      %v1324 = vxor.u32 %v1192, 2147483648
      %v1325 = vxor.u32 %v1195, 2147483648
      %v1326 = vmul.f32 %v1310, 1.442695
      %v1327 = vpow.pop %v1326
      %v1328 = vmul.f32 %v1311, 1.442695
      %v1329 = vpow.pop %v1328
      %v1330 = vmul.f32 %v1312, 1.442695
      %v1331 = vpow.pop %v1330
      %v1332 = vmul.f32 %v1313, 1.442695
      %v1333 = vpow.pop %v1332
      %v1334 = vmul.f32 %v1314, 1.442695
      %v1335 = vpow.pop %v1334
      %v1336 = vmul.f32 %v1315, 1.442695
      %v1337 = vpow.pop %v1336
      %v1338 = vmul.f32 %v1316, 1.442695
      %v1339 = vpow.pop %v1338
      %v1340 = vmul.f32 %v1317, 1.442695
      %v1341 = vpow.pop %v1340
      %v1342 = vmul.f32 %v1318, 1.442695
      %v1343 = vpow.pop %v1342
      %v1344 = vmul.f32 %v1319, 1.442695
      %v1345 = vpow.pop %v1344
      %v1346 = vmul.f32 %v1320, 1.442695
      %v1347 = vpow.pop %v1346
      %v1348 = vmul.f32 %v1321, 1.442695
      %v1349 = vpow.pop %v1348
      %v1350 = vmul.f32 %v1322, 1.442695
      %v1351 = vpow.pop %v1350
      %v1352 = vmul.f32 %v1323, 1.442695
      %v1353 = vpow.pop %v1352
      %v1354 = vmul.f32 %v1324, 1.442695
      %v1355 = vpow.pop %v1354
      %v1356 = vmul.f32 %v1325, 1.442695
      %v1357 = vpow.pop %v1356
      %v1358 = vadd.f32 %v1327, 1.0
      %v1359 = vadd.f32 %v1329, 1.0
      %v1360 = vadd.f32 %v1331, 1.0
      %v1361 = vadd.f32 %v1333, 1.0
      %v1362 = vadd.f32 %v1335, 1.0
      %v1363 = vadd.f32 %v1337, 1.0
      %v1364 = vadd.f32 %v1339, 1.0
      %v1365 = vadd.f32 %v1341, 1.0
      %v1366 = vadd.f32 %v1343, 1.0
      %v1367 = vadd.f32 %v1345, 1.0
      %v1368 = vadd.f32 %v1347, 1.0
      %v1369 = vadd.f32 %v1349, 1.0
      %v1370 = vadd.f32 %v1351, 1.0
      %v1371 = vadd.f32 %v1353, 1.0
      %v1372 = vadd.f32 %v1355, 1.0
      %v1373 = vadd.f32 %v1357, 1.0
      %v1374 = vrcp.pop %v1358
      %v1375 = vmul.f32 1.0, %v1374
      %v1376 = vrcp.pop %v1359
      %v1377 = vmul.f32 1.0, %v1376
      %v1378 = vrcp.pop %v1360
      %v1379 = vmul.f32 1.0, %v1378
      %v1380 = vrcp.pop %v1361
      %v1381 = vmul.f32 1.0, %v1380
      %v1382 = vrcp.pop %v1362
      %v1383 = vmul.f32 1.0, %v1382
      %v1384 = vrcp.pop %v1363
      %v1385 = vmul.f32 1.0, %v1384
      %v1386 = vrcp.pop %v1364
      %v1387 = vmul.f32 1.0, %v1386
      %v1388 = vrcp.pop %v1365
      %v1389 = vmul.f32 1.0, %v1388
      %v1390 = vrcp.pop %v1366
      %v1391 = vmul.f32 1.0, %v1390
      %v1392 = vrcp.pop %v1367
      %v1393 = vmul.f32 1.0, %v1392
      %v1394 = vrcp.pop %v1368
      %v1395 = vmul.f32 1.0, %v1394
      %v1396 = vrcp.pop %v1369
      %v1397 = vmul.f32 1.0, %v1396
      %v1398 = vrcp.pop %v1370
      %v1399 = vmul.f32 1.0, %v1398
      %v1400 = vrcp.pop %v1371
      %v1401 = vmul.f32 1.0, %v1400
      %v1402 = vrcp.pop %v1372
      %v1403 = vmul.f32 1.0, %v1402
      %v1404 = vrcp.pop %v1373
      %v1405 = vmul.f32 1.0, %v1404
      %v1406 = vmul.f32 %v1263, %v1294
      %v1407 = vmul.f32 %v1265, %v1295
      %v1408 = vmul.f32 %v1267, %v1296
      %v1409 = vmul.f32 %v1269, %v1297
      %v1410 = vmul.f32 %v1271, %v1298
      %v1411 = vmul.f32 %v1273, %v1299
      %v1412 = vmul.f32 %v1275, %v1300
      %v1413 = vmul.f32 %v1277, %v1301
      %v1414 = vmul.f32 %v1279, %v1302
      %v1415 = vmul.f32 %v1281, %v1303
      %v1416 = vmul.f32 %v1283, %v1304
      %v1417 = vmul.f32 %v1285, %v1305
      %v1418 = vmul.f32 %v1287, %v1306
      %v1419 = vmul.f32 %v1289, %v1307
      %v1420 = vmul.f32 %v1291, %v1308
      %v1421 = vmul.f32 %v1293, %v1309
      %v1422 = vtanh.pop %v1406
      %v1423 = vtanh.pop %v1407
      %v1424 = vtanh.pop %v1408
      %v1425 = vtanh.pop %v1409
      %v1426 = vtanh.pop %v1410
      %v1427 = vtanh.pop %v1411
      %v1428 = vtanh.pop %v1412
      %v1429 = vtanh.pop %v1413
      %v1430 = vtanh.pop %v1414
      %v1431 = vtanh.pop %v1415
      %v1432 = vtanh.pop %v1416
      %v1433 = vtanh.pop %v1417
      %v1434 = vtanh.pop %v1418
      %v1435 = vtanh.pop %v1419
      %v1436 = vtanh.pop %v1420
      %v1437 = vtanh.pop %v1421
      %v1438 = vmul.f32 %v1375, %v1422
      %v1439 = vmul.f32 %v1377, %v1423
      %v1440 = vmul.f32 %v1379, %v1424
      %v1441 = vmul.f32 %v1381, %v1425
      %v1442 = vmul.f32 %v1383, %v1426
      %v1443 = vmul.f32 %v1385, %v1427
      %v1444 = vmul.f32 %v1387, %v1428
      %v1445 = vmul.f32 %v1389, %v1429
      %v1446 = vmul.f32 %v1391, %v1430
      %v1447 = vmul.f32 %v1393, %v1431
      %v1448 = vmul.f32 %v1395, %v1432
      %v1449 = vmul.f32 %v1397, %v1433
      %v1450 = vmul.f32 %v1399, %v1434
      %v1451 = vmul.f32 %v1401, %v1435
      %v1452 = vmul.f32 %v1403, %v1436
      %v1453 = vmul.f32 %v1405, %v1437
      %v1454 = vmax.f32 %v1438, 0.0
      %v1455 = vmax.f32 %v1439, 0.0
      %v1456 = vmax.f32 %v1440, 0.0
      %v1457 = vmax.f32 %v1441, 0.0
      %v1458 = vmax.f32 %v1442, 0.0
      %v1459 = vmax.f32 %v1443, 0.0
      %v1460 = vmax.f32 %v1444, 0.0
      %v1461 = vmax.f32 %v1445, 0.0
      %v1462 = vmax.f32 %v1446, 0.0
      %v1463 = vmax.f32 %v1447, 0.0
      %v1464 = vmax.f32 %v1448, 0.0
      %v1465 = vmax.f32 %v1449, 0.0
      %v1466 = vmax.f32 %v1450, 0.0
      %v1467 = vmax.f32 %v1451, 0.0
      %v1468 = vmax.f32 %v1452, 0.0
      %v1469 = vmax.f32 %v1453, 0.0
      %v1470 = vpack.c.bf16 %v1455, %v1454
      %v1471 = vpack.c.bf16 %v1457, %v1456
      %v1472 = vpack.c.bf16 %v1459, %v1458
      %v1473 = vpack.c.bf16 %v1461, %v1460
      %v1474 = vpack.c.bf16 %v1463, %v1462
      %v1475 = vpack.c.bf16 %v1465, %v1464
      %v1476 = vpack.c.bf16 %v1467, %v1466
      %v1477 = vpack.c.bf16 %v1469, %v1468
      %v1478 = vld [vmem:[%s8] sm:$0xf]
      %v1479 = vld [vmem:[%s8 + $0x4] sm:$0xf]
      %v1480 = vld [vmem:[%s8 + $0x8] sm:$0xf]
      %v1481 = vld [vmem:[%s8 + $0xc] sm:$0xf]
      %v1482 = vld [vmem:[%s8 + $0x10] sm:$0xf]
      %v1483 = vld [vmem:[%s8 + $0x14] sm:$0xf]
      %v1484 = vld [vmem:[%s8 + $0x18] sm:$0xf]
      %v1485 = vld [vmem:[%s8 + $0x1c] sm:$0xf]
      %v1486 = vld [vmem:[%s8 + $0x20] sm:$0xf]
      %v1487 = vld [vmem:[%s8 + $0x24] sm:$0xf]
      %v1488 = vld [vmem:[%s8 + $0x28] sm:$0xf]
      %v1489 = vld [vmem:[%s8 + $0x2c] sm:$0xf]
      %v1490 = vld [vmem:[%s8 + $0x30] sm:$0xf]
      %v1491 = vld [vmem:[%s8 + $0x34] sm:$0xf]
      %v1492 = vld [vmem:[%s8 + $0x38] sm:$0xf]
      %v1493 = vld [vmem:[%s8 + $0x3c] sm:$0xf]
      %v1494 = vld [vmem:[%s9] sm:$0x1]
      %v1496 = vlaneseq
      %v1497 = vshrl.u32 %v1496, 7
      %v1498 = vsub.s32 0, %v1497
      %v1499 = vrot.slane %v1494, %v1498
      %v1517 = vunpack.c.l.b16 %v1478
      %v1518 = vunpack.c.l.b16 %v1479
      %v1519 = vunpack.c.l.b16 %v1480
      %v1520 = vunpack.c.l.b16 %v1481
      %v1521 = vunpack.c.l.b16 %v1482
      %v1522 = vunpack.c.l.b16 %v1483
      %v1523 = vunpack.c.l.b16 %v1484
      %v1524 = vunpack.c.l.b16 %v1485
      %v1525 = vunpack.c.l.b16 %v1486
      %v1526 = vunpack.c.l.b16 %v1487
      %v1527 = vunpack.c.l.b16 %v1488
      %v1528 = vunpack.c.l.b16 %v1489
      %v1529 = vunpack.c.l.b16 %v1490
      %v1530 = vunpack.c.l.b16 %v1491
      %v1531 = vunpack.c.l.b16 %v1492
      %v1532 = vunpack.c.l.b16 %v1493
      %v1533 = vpack.c.b16 %v1518, %v1517
      %v1534 = vpack.c.b16 %v1520, %v1519
      %v1535 = vpack.c.b16 %v1522, %v1521
      %v1536 = vpack.c.b16 %v1524, %v1523
      %v1537 = vpack.c.b16 %v1526, %v1525
      %v1538 = vpack.c.b16 %v1528, %v1527
      %v1539 = vpack.c.b16 %v1530, %v1529
      %v1540 = vpack.c.b16 %v1532, %v1531
      %1549 = vmatprep.subr.bf16.mxu0 0
      %1550 = vmatpush1.bf16.msra.mxu0 %v1540
      %1551 = vmatprep.subr.bf16.mxu0 0
      %1552 = vmatpush1.bf16.msra.mxu0 %v1539
      %1553 = vmatprep.subr.bf16.mxu0 0
      %1554 = vmatpush1.bf16.msra.mxu0 %v1538
      %1555 = vmatprep.subr.bf16.mxu0 0
      %1556 = vmatpush1.bf16.msra.mxu0 %v1537
      %1557 = vmatprep.subr.bf16.mxu0 0
      %1558 = vmatpush1.bf16.msra.mxu0 %v1536
      %1559 = vmatprep.subr.bf16.mxu0 0
      %1560 = vmatpush1.bf16.msra.mxu0 %v1535
      %1561 = vmatprep.subr.bf16.mxu0 0
      %1562 = vmatpush1.bf16.msra.mxu0 %v1534
      %1563 = vmatprep.subr.bf16.mxu0 0
      %1564 = vmatpush1.bf16.msra.mxu0 %v1533
      %1565 = vmatprep.subr.bf16.mxu0 0
      %1566 = vmatpush2.bf16.msra.mxu0 0
      %1567 = vmatprep.subr.bf16.mxu0 0
      %1568 = vmatpush2.bf16.msra.mxu0 0
      %1569 = vmatprep.subr.bf16.mxu0 0
      %1570 = vmatpush2.bf16.msra.mxu0 0
      %1571 = vmatprep.subr.bf16.mxu0 0
      %1572 = vmatpush2.bf16.msra.mxu0 0
      %1573 = vmatprep.subr.bf16.mxu0 0
      %1574 = vmatpush2.bf16.msra.mxu0 0
      %1575 = vmatprep.subr.bf16.mxu0 0
      %1576 = vmatpush2.bf16.msra.mxu0 0
      %1577 = vmatprep.subr.bf16.mxu0 0
      %1578 = vmatpush2.bf16.msra.mxu0 0
      %1579 = vmatprep.subr.bf16.mxu0 0
      %1580 = vmatpush2.bf16.msra.mxu0 0
      %1581 = vmatprep.mubr.bf16.mxu0 0
      %1582 = vmatmul.mubr.bf16.gmra.mxu0 %v1470
      %v1583 = vpop.f32.mrf.mxu0
      %v1584 = vadd.f32 %v1499, %v1583
      %v1585 = vpop.f32.mrf.mxu0
      %v1586 = vpop.f32.mrf.mxu0
      %v1587 = vadd.f32 %v1499, %v1586
      %v1588 = vpop.f32.mrf.mxu0
      %1589 = vmatprep.mubr.bf16.mxu0 0
      %1590 = vmatmul.mubr.bf16.gmra.mxu0 %v1471
      %v1591 = vpop.f32.mrf.mxu0
      %v1592 = vadd.f32 %v1499, %v1591
      %v1593 = vpop.f32.mrf.mxu0
      %v1594 = vpop.f32.mrf.mxu0
      %v1595 = vadd.f32 %v1499, %v1594
      %v1596 = vpop.f32.mrf.mxu0
      %1597 = vmatprep.mubr.bf16.mxu0 0
      %1598 = vmatmul.mubr.bf16.gmra.mxu0 %v1472
      %v1599 = vpop.f32.mrf.mxu0
      %v1600 = vadd.f32 %v1499, %v1599
      %v1601 = vpop.f32.mrf.mxu0
      %v1602 = vpop.f32.mrf.mxu0
      %v1603 = vadd.f32 %v1499, %v1602
      %v1604 = vpop.f32.mrf.mxu0
      %1605 = vmatprep.mubr.bf16.mxu0 0
      %1606 = vmatmul.mubr.bf16.gmra.mxu0 %v1473
      %v1607 = vpop.f32.mrf.mxu0
      %v1608 = vadd.f32 %v1499, %v1607
      %v1609 = vpop.f32.mrf.mxu0
      %v1610 = vpop.f32.mrf.mxu0
      %v1611 = vadd.f32 %v1499, %v1610
      %v1612 = vpop.f32.mrf.mxu0
      %1613 = vmatprep.mubr.bf16.mxu0 0
      %1614 = vmatmul.mubr.bf16.gmra.mxu0 %v1474
      %v1615 = vpop.f32.mrf.mxu0
      %v1616 = vadd.f32 %v1499, %v1615
      %v1617 = vpop.f32.mrf.mxu0
      %v1618 = vpop.f32.mrf.mxu0
      %v1619 = vadd.f32 %v1499, %v1618
      %v1620 = vpop.f32.mrf.mxu0
      %1621 = vmatprep.mubr.bf16.mxu0 0
      %1622 = vmatmul.mubr.bf16.gmra.mxu0 %v1475
      %v1623 = vpop.f32.mrf.mxu0
      %v1624 = vadd.f32 %v1499, %v1623
      %v1625 = vpop.f32.mrf.mxu0
      %v1626 = vpop.f32.mrf.mxu0
      %v1627 = vadd.f32 %v1499, %v1626
      %v1628 = vpop.f32.mrf.mxu0
      %1629 = vmatprep.mubr.bf16.mxu0 0
      %1630 = vmatmul.mubr.bf16.gmra.mxu0 %v1476
      %v1631 = vpop.f32.mrf.mxu0
      %v1632 = vadd.f32 %v1499, %v1631
      %v1633 = vpop.f32.mrf.mxu0
      %v1634 = vpop.f32.mrf.mxu0
      %v1635 = vadd.f32 %v1499, %v1634
      %v1636 = vpop.f32.mrf.mxu0
      %1637 = vmatprep.mubr.bf16.mxu0 0
      %1638 = vmatmul.mubr.bf16.gmra.mxu0 %v1477
      %v1639 = vpop.f32.mrf.mxu0
      %v1640 = vadd.f32 %v1499, %v1639
      %v1641 = vpop.f32.mrf.mxu0
      %v1642 = vpop.f32.mrf.mxu0
      %v1643 = vadd.f32 %v1499, %v1642
      %v1644 = vpop.f32.mrf.mxu0
      %1645 = vdwg.mxu0
      %1646 = vst [vmem:[%s396] sm:$0xff] %v1584
      %1647 = vst [vmem:[%s396 + $0x8] sm:$0xff] %v1587
      %1648 = vst [vmem:[%s396 + $0x10] sm:$0xff] %v1592
      %1649 = vst [vmem:[%s396 + $0x18] sm:$0xff] %v1595
      %1650 = vst [vmem:[%s396 + $0x20] sm:$0xff] %v1600
      %1651 = vst [vmem:[%s396 + $0x28] sm:$0xff] %v1603
      %1652 = vst [vmem:[%s396 + $0x30] sm:$0xff] %v1608
      %1653 = vst [vmem:[%s396 + $0x38] sm:$0xff] %v1611
      %1654 = vst [vmem:[%s396 + $0x40] sm:$0xff] %v1616
      %1655 = vst [vmem:[%s396 + $0x48] sm:$0xff] %v1619
      %1656 = vst [vmem:[%s396 + $0x50] sm:$0xff] %v1624
      %1657 = vst [vmem:[%s396 + $0x58] sm:$0xff] %v1627
      %1658 = vst [vmem:[%s396 + $0x60] sm:$0xff] %v1632
      %1659 = vst [vmem:[%s396 + $0x68] sm:$0xff] %v1635
      %1660 = vst [vmem:[%s396 + $0x70] sm:$0xff] %v1640
      %1661 = vst [vmem:[%s396 + $0x78] sm:$0xff] %v1643
      %s1662 = smul.u32 %s24, 128
      %v1663 = vlaneseq
      %v1664 = vshrl.u32 %v1663, 7
      %v1665 = vadd.s32 %v1664, 8
      %v1666 = vadd.s32 %v1664, 16
      %v1667 = vadd.s32 %v1664, 24
      %v1668 = vadd.s32 %v1664, 32
      %v1669 = vadd.s32 %v1664, 40
      %v1670 = vadd.s32 %v1664, 48
      %v1671 = vadd.s32 %v1664, 56
      %v1672 = vadd.s32 %v1664, 64
      %v1673 = vadd.s32 %v1664, 72
      %v1674 = vadd.s32 %v1664, 80
      %v1675 = vadd.s32 %v1664, 88
      %v1676 = vadd.s32 %v1664, 96
      %v1677 = vadd.s32 %v1664, 104
      %v1678 = vadd.s32 %v1664, 112
      %v1679 = vadd.s32 %v1664, 120
      %v1680 = vstv %s1662
      %v1681 = vadd.s32 %v1680, %v1664
      %v1682 = vadd.s32 %v1680, %v1665
      %v1683 = vadd.s32 %v1680, %v1666
      %v1684 = vadd.s32 %v1680, %v1667
      %v1685 = vadd.s32 %v1680, %v1668
      %v1686 = vadd.s32 %v1680, %v1669
      %v1687 = vadd.s32 %v1680, %v1670
      %v1688 = vadd.s32 %v1680, %v1671
      %v1689 = vadd.s32 %v1680, %v1672
      %v1690 = vadd.s32 %v1680, %v1673
      %v1691 = vadd.s32 %v1680, %v1674
      %v1692 = vadd.s32 %v1680, %v1675
      %v1693 = vadd.s32 %v1680, %v1676
      %v1694 = vadd.s32 %v1680, %v1677
      %v1695 = vadd.s32 %v1680, %v1678
      %v1696 = vadd.s32 %v1680, %v1679
      %s1697 = sld [smem:[#allocation2]]
      %v1698 = vstv %s1697
      %vm1699 = vcmp.lt.s32.totalorder %v1681, %v1698
      %vm1700 = vcmp.lt.s32.totalorder %v1682, %v1698
      %vm1701 = vcmp.lt.s32.totalorder %v1683, %v1698
      %vm1702 = vcmp.lt.s32.totalorder %v1684, %v1698
      %vm1703 = vcmp.lt.s32.totalorder %v1685, %v1698
      %vm1704 = vcmp.lt.s32.totalorder %v1686, %v1698
      %vm1705 = vcmp.lt.s32.totalorder %v1687, %v1698
      %vm1706 = vcmp.lt.s32.totalorder %v1688, %v1698
      %vm1707 = vcmp.lt.s32.totalorder %v1689, %v1698
      %vm1708 = vcmp.lt.s32.totalorder %v1690, %v1698
      %vm1709 = vcmp.lt.s32.totalorder %v1691, %v1698
      %vm1710 = vcmp.lt.s32.totalorder %v1692, %v1698
      %vm1711 = vcmp.lt.s32.totalorder %v1693, %v1698
      %vm1712 = vcmp.lt.s32.totalorder %v1694, %v1698
      %vm1713 = vcmp.lt.s32.totalorder %v1695, %v1698
      %vm1714 = vcmp.lt.s32.totalorder %v1696, %v1698
      %v1715 = vsel %vm1699, %v1584, 0.0
      %v1716 = vsel %vm1700, %v1587, 0.0
      %v1717 = vsel %vm1701, %v1592, 0.0
      %v1718 = vsel %vm1702, %v1595, 0.0
      %v1719 = vsel %vm1703, %v1600, 0.0
      %v1720 = vsel %vm1704, %v1603, 0.0
      %v1721 = vsel %vm1705, %v1608, 0.0
      %v1722 = vsel %vm1706, %v1611, 0.0
      %v1723 = vsel %vm1707, %v1616, 0.0
      %v1724 = vsel %vm1708, %v1619, 0.0
      %v1725 = vsel %vm1709, %v1624, 0.0
      %v1726 = vsel %vm1710, %v1627, 0.0
      %v1727 = vsel %vm1711, %v1632, 0.0
      %v1728 = vsel %vm1712, %v1635, 0.0
      %v1729 = vsel %vm1713, %v1640, 0.0
      %v1730 = vsel %vm1714, %v1643, 0.0
      %v1731 = vadd.f32 %v1715, %v1716
      %v1732 = vadd.f32 %v1731, %v1717
      %v1733 = vadd.f32 %v1732, %v1718
      %v1734 = vadd.f32 %v1733, %v1719
      %v1735 = vadd.f32 %v1734, %v1720
      %v1736 = vadd.f32 %v1735, %v1721
      %v1737 = vadd.f32 %v1736, %v1722
      %v1738 = vadd.f32 %v1737, %v1723
      %v1739 = vadd.f32 %v1738, %v1724
      %v1740 = vadd.f32 %v1739, %v1725
      %v1741 = vadd.f32 %v1740, %v1726
      %v1742 = vadd.f32 %v1741, %v1727
      %v1743 = vadd.f32 %v1742, %v1728
      %v1744 = vadd.f32 %v1743, %v1729
      %v1745 = vadd.f32 %v1744, %v1730
      %v1746 = vrot.slane %v1745, 4
      %v1747 = vadd.f32 %v1745, %v1746
      %v1748 = vrot.slane %v1747, 2
      %v1749 = vadd.f32 %v1747, %v1748
      %v1750 = vrot.slane %v1749, 1
      %v1751 = vadd.f32 %v1749, %v1750
      %1752 = vst [vmem:[%s401] sm:$0xff] %v1751
      %s1753 = smul.u32 16, %s24
      %p1754 = scmp.lt.s32.totalorder %s1753, 31
      %s1755 = scalar_select %p1754, %s1753, 31
      %s1756 = smul.addr %s1755, 8
      %s1757 = scalar_lea.vmem %s10, %s1756
      %p1758 = scmp.lt.s32.totalorder %s24, 1
      %s1759 = scalar_select %p1758, %s24, 1
      %s1760 = smul.addr %s1759, 8
      %s1761 = scalar_lea.vmem %s11, %s1760
      // Predicated region
      $region61: #{neural_network_forward.2} parent=59 // pred_check
        %p1762 = pneg %p257
      $region62: #{neural_network_forward.2} parent=59 // pred_check_branch
        %1764 = sbr.rel (%p1762) target = $region64
      $region63: #{neural_network_forward.2} parent=59 // pred_region
        %s1765 = smul.u32 16, %s24
      $region64: #{neural_network_forward.2} parent=59 // pred_fallthru
        _
      // Predicated region
      $region65: #{neural_network_forward.2} parent=59 // pred_check
        %p1766 = pneg %p283
      $region66: #{neural_network_forward.2} parent=59 // pred_check_branch
        %1768 = sbr.rel (%p1766) target = $region68
      $region67: #{neural_network_forward.2} parent=59 // pred_region
        _
      $region68: #{neural_network_forward.2} parent=59 // pred_fallthru
        _
    $region60: #{neural_network_forward.2} parent=5 // pred_fallthru
      _
    %p1769 = scmp.le.s32.totalorder 2, %s19
    // Predicated region
    $region69: #{neural_network_forward.2} parent=5 // pred_check
      %p1770 = pneg %p1769
    $region70: #{neural_network_forward.2} parent=5 // pred_check_branch
      %1772 = sbr.rel (%p1770) target = $region72
    $region71: #{neural_network_forward.2} parent=5 // pred_region
      %s1773 = ssub.s32 %s19, 2
      // Predicated region
      $region73: #{neural_network_forward.2} parent=71 // pred_check
        %p1774 = pneg %p263
      $region74: #{neural_network_forward.2} parent=71 // pred_check_branch
        %1776 = sbr.rel (%p1774) target = $region76
      $region75: #{neural_network_forward.2} parent=71 // pred_region
        %s1777 = smul.u32 16, %s25
        %p1778 = scmp.lt.s32.totalorder %s1777, 31
        %s1779 = scalar_select %p1778, %s1777, 31
        %s1780 = smul.addr %s1779, 8
        %s1781 = scalar_lea.vmem %s10, %s1780
      $region76: #{neural_network_forward.2} parent=71 // pred_fallthru
        _
      // Predicated region
      $region77: #{neural_network_forward.2} parent=71 // pred_check
        %p1782 = pneg %p289
      $region78: #{neural_network_forward.2} parent=71 // pred_check_branch
        %1784 = sbr.rel (%p1782) target = $region80
      $region79: #{neural_network_forward.2} parent=71 // pred_region
        %p1785 = scmp.lt.s32.totalorder %s25, 1
        %s1786 = scalar_select %p1785, %s25, 1
        %s1787 = smul.addr %s1786, 8
        %s1788 = scalar_lea.vmem %s11, %s1787
      $region80: #{neural_network_forward.2} parent=71 // pred_fallthru
        _
    $region72: #{neural_network_forward.2} parent=5 // pred_fallthru
      _
  $region6: #{neural_network_forward.2} parent=0 // loop_footer
    %s23 = sadd.s32 1, %s19
  $region7: #{neural_network_forward.2} parent=0 // loop_footer_branch
    %18 = sbr.rel target = $region3
  $region8: #{neural_network_forward.2} parent=0 // loop_exit
    _

</llo_original>
